<compile_context>
chip_gen: v7x
topology: tpu7x:2x2x1
jax: 0.10.0
libtpu: 0.0.40
codegen_flags: <defaults>
</compile_context>

<pallas_src>
import functools

import numpy as np

import jax
import jax.numpy as jnp
from jax.experimental import pallas as pl
from jax.experimental.pallas import tpu as pltpu


def _conv_as_matmul_matrix(conv_w, H, W):
    """(1, 2, K, K) conv weights -> (2*H*W, H*W) matrix so that
    [avg_flat | max_flat] @ M == Conv2d(2, 1, K, padding=K//2) (bias excluded)."""
    K = conv_w.shape[-1]
    P = K // 2
    HW = H * W
    w = np.asarray(conv_w, dtype=np.float32).reshape(2, K, K)
    m = np.zeros((2, HW, HW), dtype=np.float32)
    ys, xs = np.meshgrid(np.arange(H), np.arange(W), indexing="ij")
    out_idx = (ys * W + xs).reshape(-1)
    for dy in range(K):
        for dx in range(K):
            iy = ys + dy - P
            ix = xs + dx - P
            valid = ((iy >= 0) & (iy < H) & (ix >= 0) & (ix < W)).reshape(-1)
            in_idx = (np.clip(iy, 0, H - 1) * W
                      + np.clip(ix, 0, W - 1)).reshape(-1)
            for ci in range(2):
                m[ci, in_idx[valid], out_idx[valid]] += w[ci, dy, dx]
    return m.reshape(2 * HW, HW)


def _spatial_attention_kernel(x_ref, wmat_ref, b_ref, o_ref, *, C):
    # x_ref   : (bt*C, HW)  VMEM  bt images, channels stacked along sublanes
    # wmat_ref: (2*HW, HW)  VMEM  conv-as-matmul matrix ("same" padding baked in)
    # b_ref   : (1,)        SMEM  conv bias
    # o_ref   : (bt*C, HW)  VMEM
    rows, HW = x_ref.shape
    bt = rows // C
    inv_c = 1.0 / C

    xs = x_ref[...]                                   # one dense lane-aligned load

    # ---- per-image channel mean / max -> one (bt, 2*HW) row per image ------
    cat_rows = []
    for b in range(bt):
        slab = xs[b * C:(b + 1) * C, :].astype(jnp.float32)     # (C, HW)
        avg = jnp.sum(slab, axis=0, keepdims=True) * inv_c      # (1, HW)
        mx = jnp.max(slab, axis=0, keepdims=True)               # (1, HW)
        cat_rows.append(jnp.concatenate([avg, mx], axis=-1))    # (1, 2*HW)
    cat = jnp.concatenate(cat_rows, axis=0) if bt > 1 else cat_rows[0]

    # ---- 2 -> 1 KxK "same" conv == one MXU matmul + bias --------------------
    pre = jnp.dot(cat, wmat_ref[...],
                  preferred_element_type=jnp.float32,
                  precision=jax.lax.Precision.HIGHEST) + b_ref[0]
    attn = jax.nn.sigmoid(pre)                                  # (bt, HW) f32

    # ---- x * attention_map, one dense lane-aligned store --------------------
    out_rows = []
    for b in range(bt):
        a_b = attn[b:b + 1, :].astype(xs.dtype)                 # (1, HW)
        out_rows.append(xs[b * C:(b + 1) * C, :] * a_b)         # (C, HW)
    out = jnp.concatenate(out_rows, axis=0) if bt > 1 else out_rows[0]
    o_ref[...] = out.astype(o_ref.dtype)


def spatial_attention(x, conv_w, conv_b, *, block_budget_bytes=4 * 1024 * 1024):
    """x: (B, C, H, W) or (C, H, W); conv_w: (1, 2, K, K); conv_b: (1,)."""
    if x.ndim == 3:
        # PyTorch's forward unsqueezes and keeps the batch dim in the output.
        x = x[None]
    B, C, H, W = x.shape
    HW = H * W

    # Lane-dense layout: (B, C, H, W) -> (B*C, HW); contiguous, copy-free.
    x2d = x.reshape(B * C, HW)

    # Conv rewritten as a matmul matrix (built host-side, padding baked in).
    # TODO(synk): for large H*W the dense matrix grows as (H*W)^2 — fall back
    # to a shifted-tap conv there instead of the conv-as-matmul path.
    wmat = jnp.asarray(_conv_as_matmul_matrix(conv_w, H, W))    # (2*HW, HW) f32
    bias = jnp.asarray(conv_b, jnp.float32).reshape(1)

    # Fold several images per grid step (amortize per-step pipeline overhead)
    # while keeping the block's sublane count 8-aligned and input + output
    # blocks (double-buffered ~4x) inside a modest VMEM budget.
    bt_cap = max(1, block_budget_bytes // (4 * C * HW * x.dtype.itemsize))
    bt_cap = min(bt_cap, 8, B)
    cands = [d for d in range(1, bt_cap + 1)
             if B % d == 0 and ((d * C) % 8 == 0 or d == B)]
    bt = max(cands) if cands else B

    kernel = functools.partial(_spatial_attention_kernel, C=C)

    out2d = pl.pallas_call(
        kernel,
        out_shape=jax.ShapeDtypeStruct((B * C, HW), x.dtype),
        grid=(B // bt,),
        in_specs=[
            pl.BlockSpec((bt * C, HW), lambda i: (i, 0)),
            pl.BlockSpec((2 * HW, HW), lambda i: (0, 0)),   # fetched once, reused
            pl.BlockSpec(memory_space=pltpu.MemorySpace.SMEM),
        ],
        out_specs=pl.BlockSpec((bt * C, HW), lambda i: (i, 0)),
        compiler_params=pltpu.CompilerParams(
            dimension_semantics=("parallel",)),
    )(x2d, wmat, bias)

    return out2d.reshape(B, C, H, W)


def _reference(x, conv_w, conv_b):
    """Pure-JAX reference (mirrors the PyTorch forward)."""
    if x.ndim == 3:
        x = x[None]
    avg = jnp.mean(x, axis=1, keepdims=True)
    mx = jnp.max(x, axis=1, keepdims=True)
    cat = jnp.concatenate([avg, mx], axis=1)
    K = conv_w.shape[-1]
    conv = jax.lax.conv_general_dilated(
        cat, conv_w, window_strides=(1, 1),
        padding=[(K // 2, K // 2), (K // 2, K // 2)],
        dimension_numbers=("NCHW", "OIHW", "NCHW"),
        precision=jax.lax.Precision.HIGHEST,
    ) + conv_b.reshape(1, 1, 1, 1)
    return x * jax.nn.sigmoid(conv)


if __name__ == "__main__":
    key = jax.random.PRNGKey(0)
    k_x, k_w, k_b = jax.random.split(key, 3)

    B, C, H, W = 2, 4, 16, 16
    K = 7

    x = jax.random.normal(k_x, (B, C, H, W), dtype=jnp.float32)
    # deterministic synthetic Conv2d(2, 1, 7) parameters
    fan_in = 2 * K * K
    bound = 1.0 / (fan_in ** 0.5)
    conv_w = jax.random.uniform(k_w, (1, 2, K, K), jnp.float32, -bound, bound)
    conv_b = jax.random.uniform(k_b, (1,), jnp.float32, -bound, bound)

    out = spatial_attention(x, conv_w, conv_b)
    out = jax.block_until_ready(out)

    ref = _reference(x, conv_w, conv_b)
    assert out.shape == ref.shape
    assert jnp.allclose(out, ref, atol=1e-4, rtol=1e-4), (
        float(jnp.max(jnp.abs(out - ref)))
    )

    print("KERNEL_OK")
</pallas_src>

<mosaic_0001>
module attributes {stable_mosaic.version = 11 : i64} {
  func.func @_spatial_attention_kernel(%arg0: i32, %arg1: memref<8x256xf32, #tpu.memory_space<vmem>>, %arg2: memref<512x256xf32, #tpu.memory_space<vmem>>, %arg3: memref<1xf32, #tpu.memory_space<smem>>, %arg4: memref<8x256xf32, #tpu.memory_space<vmem>>) attributes {dimension_semantics = [#tpu.dimension_semantics<parallel>], iteration_bounds = array<i64: 1>, scalar_prefetch = 0 : i64, scratch_operands = 0 : i64, tpu.core_type = #tpu.core_type<tc>, window_params = [{transform_indices = @transform_0, window_bounds = array<i64: 8, 256>}, {pipeline_mode = #tpu.pipeline_mode<synchronous>, transform_indices = @transform_1, window_bounds = array<i64: 512, 256>}, {transform_indices = @transform_2, window_bounds = array<i64: 1>}, {transform_indices = @transform_3, window_bounds = array<i64: 8, 256>}]} {
    %c0 = arith.constant 0 : index
    %c0_0 = arith.constant 0 : index
    %0 = vector.load %arg1[%c0, %c0_0] : memref<8x256xf32, #tpu.memory_space<vmem>>, vector<8x256xf32>
    %1 = vector.extract_strided_slice %0 {offsets = [0, 0], sizes = [4, 256], strides = [1, 1]} : vector<8x256xf32> to vector<4x256xf32>
    %cst = arith.constant dense<0.000000e+00> : vector<256xf32>
    %2 = vector.multi_reduction <add>, %1, %cst [0] : vector<4x256xf32> to vector<256xf32>
    %3 = vector.shape_cast %2 : vector<256xf32> to vector<1x256xf32>
    %cst_1 = arith.constant 2.500000e-01 : f32
    %4 = vector.broadcast %cst_1 : f32 to vector<1x256xf32>
    %5 = arith.mulf %3, %4 : vector<1x256xf32>
    %cst_2 = arith.constant dense<0xFF800000> : vector<256xf32>
    %6 = vector.multi_reduction <maximumf>, %1, %cst_2 [0] : vector<4x256xf32> to vector<256xf32>
    %7 = vector.shape_cast %6 : vector<256xf32> to vector<1x256xf32>
    %8 = tpu.concatenate %5, %7 in 1 : vector<1x256xf32>, vector<1x256xf32> -> vector<1x512xf32>
    %9 = vector.extract_strided_slice %0 {offsets = [4, 0], sizes = [4, 256], strides = [1, 1]} : vector<8x256xf32> to vector<4x256xf32>
    %cst_3 = arith.constant dense<0.000000e+00> : vector<256xf32>
    %10 = vector.multi_reduction <add>, %9, %cst_3 [0] : vector<4x256xf32> to vector<256xf32>
    %11 = vector.shape_cast %10 : vector<256xf32> to vector<1x256xf32>
    %cst_4 = arith.constant 2.500000e-01 : f32
    %12 = vector.broadcast %cst_4 : f32 to vector<1x256xf32>
    %13 = arith.mulf %11, %12 : vector<1x256xf32>
    %cst_5 = arith.constant dense<0xFF800000> : vector<256xf32>
    %14 = vector.multi_reduction <maximumf>, %9, %cst_5 [0] : vector<4x256xf32> to vector<256xf32>
    %15 = vector.shape_cast %14 : vector<256xf32> to vector<1x256xf32>
    %16 = tpu.concatenate %13, %15 in 1 : vector<1x256xf32>, vector<1x256xf32> -> vector<1x512xf32>
    %17 = tpu.concatenate %8, %16 in 0 : vector<1x512xf32>, vector<1x512xf32> -> vector<2x512xf32>
    %c0_6 = arith.constant 0 : index
    %c0_7 = arith.constant 0 : index
    %18 = vector.load %arg2[%c0_6, %c0_7] : memref<512x256xf32, #tpu.memory_space<vmem>>, vector<512x256xf32>
    %cst_8 = arith.constant dense<0.000000e+00> : vector<2x256xf32>
    %19 = tpu.matmul %17, %18, %cst_8 {dimension_numbers = #tpu.dot_dimension_numbers<[1], [0], [0], [1], [0, 0, 1, 1], [], []>, precision = #tpu.contract_precision<fp32>} : vector<2x512xf32>, vector<512x256xf32>, vector<2x256xf32> -> vector<2x256xf32>
    %c0_9 = arith.constant 0 : index
    %20 = memref.load %arg3[%c0_9] : memref<1xf32, #tpu.memory_space<smem>>
    %21 = vector.broadcast %20 : f32 to vector<2x256xf32>
    %22 = arith.addf %19, %21 : vector<2x256xf32>
    %23 = arith.negf %22 : vector<2x256xf32>
    %24 = math.exp %23 : vector<2x256xf32>
    %cst_10 = arith.constant 1.000000e+00 : f32
    %25 = vector.broadcast %cst_10 : f32 to vector<2x256xf32>
    %26 = arith.addf %25, %24 : vector<2x256xf32>
    %27 = arith.divf %25, %26 : vector<2x256xf32>
    %28 = vector.extract_strided_slice %27 {offsets = [0, 0], sizes = [1, 256], strides = [1, 1]} : vector<2x256xf32> to vector<1x256xf32>
    %29 = vector.extract_strided_slice %0 {offsets = [0, 0], sizes = [4, 256], strides = [1, 1]} : vector<8x256xf32> to vector<4x256xf32>
    %30 = vector.broadcast %28 : vector<1x256xf32> to vector<4x256xf32>
    %31 = arith.mulf %29, %30 : vector<4x256xf32>
    %32 = vector.extract_strided_slice %27 {offsets = [1, 0], sizes = [1, 256], strides = [1, 1]} : vector<2x256xf32> to vector<1x256xf32>
    %33 = vector.extract_strided_slice %0 {offsets = [4, 0], sizes = [4, 256], strides = [1, 1]} : vector<8x256xf32> to vector<4x256xf32>
    %34 = vector.broadcast %32 : vector<1x256xf32> to vector<4x256xf32>
    %35 = arith.mulf %33, %34 : vector<4x256xf32>
    %36 = tpu.concatenate %31, %35 in 0 : vector<4x256xf32>, vector<4x256xf32> -> vector<8x256xf32>
    %c0_11 = arith.constant 0 : index
    %c0_12 = arith.constant 0 : index
    %37 = vector.load %arg4[%c0_11, %c0_12] : memref<8x256xf32, #tpu.memory_space<vmem>>, vector<8x256xf32>
    tpu.vector_store %arg4[%c0_11, %c0_12], %36 {strides = array<i32>} : memref<8x256xf32, #tpu.memory_space<vmem>>, vector<8x256xf32>,
    return
  }
  func.func @transform_0(%arg0: i32) -> (i32, i32) {
    %c0_i32 = arith.constant 0 : i32
    %c0_i32_0 = arith.constant 0 : i32
    return %arg0, %c0_i32 : i32, i32
  }
  func.func @transform_1(%arg0: i32) -> (i32, i32) {
    %c0_i32 = arith.constant 0 : i32
    %c0_i32_0 = arith.constant 0 : i32
    %c0_i32_1 = arith.constant 0 : i32
    return %c0_i32, %c0_i32_0 : i32, i32
  }
  func.func @transform_2(%arg0: i32) -> i32 {
    %c0_i32 = arith.constant 0 : i32
    %c0_i32_0 = arith.constant 0 : i32
    return %c0_i32 : i32
  }
  func.func @transform_3(%arg0: i32) -> (i32, i32) {
    %c0_i32 = arith.constant 0 : i32
    %c0_i32_0 = arith.constant 0 : i32
    return %arg0, %c0_i32 : i32, i32
  }
}

</mosaic_0001>

<llo_original>
// kernel: tpu_custom_call.1
$region0: #{tpu_custom_call.1}
  #allocation0 [shape = 'u32[]', space=smem, size = 0x4, offset = 0x4, fixed_abs, tag = 'smem constant byte address 0x4 - core index']
  #allocation1 [shape = 'u32[144,128]{1,0:T(1,128)}', space=vmem, size = 0x12000, scoped, tag = 'internal scratch']
  #allocation2 [shape = 'f32[1]{0:T(128)S(6)}', space=smem, size = 0x200, scoped, tag = 'scoped memory for tpu_custom_call.1']
  %s0 = inlined_call_operand.hbm [shape: f32[8,256], index: 0, kind: input, shape index: {}]
  %s1 = inlined_call_operand.hbm [shape: f32[512,256], index: 1, kind: input, shape index: {}]
  %s2 = inlined_call_operand.<no memory space> [shape: f32[1], index: 2, kind: input, shape index: {}]
  %s3 = inlined_call_operand.hbm [shape: f32[8,256], index: 3, kind: output, shape index: {}]
  %s4 = sld [smem:[#allocation0]]
  $region30: #{tpu_custom_call.1} parent=0
    _
  %s6 = ssub.s32 1, %s4
  %s7 = scalar_select 0, %s6, %s4
  %8 = sst [smem:[#allocation2]] %s2
  $region1: #{tpu_custom_call.1} parent=0
    #allocation3 [shape = 'u8[8192]{0}', space=vmem, size = 0x2000, scoped, tag = 'input window, operand 0, single buffered']
    #allocation4 [shape = 's32[1]{0}', space=sflag, size = 0x4, scoped, tag = 'scoped memory for tpu_custom_call.1']
    #allocation5 [shape = 's32[1]{0}', space=sflag, size = 0x4, scoped, tag = 'scoped memory for tpu_custom_call.1']
    #allocation6 [shape = 'u8[524288]{0}', space=vmem, size = 0x80000, scoped, tag = 'input window, operand 1, single buffered']
    #allocation7 [shape = 's32[1]{0}', space=sflag, size = 0x4, scoped, tag = 'scoped memory for tpu_custom_call.1']
    #allocation8 [shape = 'u8[8192]{0}', space=vmem, size = 0x2000, scoped, tag = 'output window, operand 0, single buffered']
    %9 = vsyncpa [#allocation4], 0
    %10 = vsyncpa [#allocation7], 0
    %11 = vsyncpa [#allocation5], 0
    // Predicated region
    $region2: #{tpu_custom_call.1} parent=1 // pred_check
      _
    $region3: #{tpu_custom_call.1} parent=1 // pred_check_branch
      %13 = sbr.rel (0) target = $region5
    $region4: #{tpu_custom_call.1} parent=1 // pred_region
      %s15 = ssub.s32 256, 256
      %16 = vsyncadd [#allocation4], %s15
      %s18 = sshll.u32 [#allocation3], 4
      %s19 = int_to_ptr.vmem [resolvable:$true] %s18
      %21 = dma.hbm_to_vmem [thread:$0]  %s0, 256, %s19, [#allocation4]
    $region5: #{tpu_custom_call.1} parent=1 // pred_fallthru
      _
    // Predicated region
    $region6: #{tpu_custom_call.1} parent=1 // pred_check
      _
    $region7: #{tpu_custom_call.1} parent=1 // pred_check_branch
      %23 = sbr.rel (0) target = $region9
    $region8: #{tpu_custom_call.1} parent=1 // pred_region
      %s25 = ssub.s32 16384, 16384
      %26 = vsyncadd [#allocation7], %s25
      %s27 = sshll.u32 [#allocation6], 4
      %s28 = int_to_ptr.vmem [resolvable:$true] %s27
      %33 = dma.hbm_to_vmem [thread:$0]  %s1, 16384, %s28, [#allocation7], 256, 256, 16
    $region9: #{tpu_custom_call.1} parent=1 // pred_fallthru
      _
    // Predicated region
    $region10: #{tpu_custom_call.1} parent=1 // pred_check
      _
    $region11: #{tpu_custom_call.1} parent=1 // pred_check_branch
      %35 = sbr.rel (0) target = $region13
    $region12: #{tpu_custom_call.1} parent=1 // pred_region
      _
    $region13: #{tpu_custom_call.1} parent=1 // pred_fallthru
      _
    // Predicated region
    $region14: #{tpu_custom_call.1} parent=1 // pred_check
      _
    $region15: #{tpu_custom_call.1} parent=1 // pred_check_branch
      %37 = sbr.rel (0) target = $region17
    $region16: #{tpu_custom_call.1} parent=1 // pred_region
      %38 = dma.done [#allocation4], 256
    $region17: #{tpu_custom_call.1} parent=1 // pred_fallthru
      _
    // Predicated region
    $region18: #{tpu_custom_call.1} parent=1 // pred_check
      _
    $region19: #{tpu_custom_call.1} parent=1 // pred_check_branch
      %40 = sbr.rel (0) target = $region21
    $region20: #{tpu_custom_call.1} parent=1 // pred_region
      %41 = dma.done [#allocation7], 16384
    $region21: #{tpu_custom_call.1} parent=1 // pred_fallthru
      _
    %v42 = vld [vmem:[#allocation3] sm:$0xff]
    %v43 = vld [vmem:[#allocation3 + $0x8] sm:$0xff]
    %vm44 = vcmask 1043456
    %v45 = vsel %vm44, %v42, 0.0
    %v46 = vrot.slane %v45, 4
    %v47 = vadd.f32 %v45, %v46
    %v48 = vrot.slane %v47, 2
    %v49 = vadd.f32 %v47, %v48
    %v50 = vrot.slane %v49, 1
    %v51 = vadd.f32 %v49, %v50
    %v52 = vsel %vm44, %v43, 0.0
    %v53 = vrot.slane %v52, 4
    %v54 = vadd.f32 %v52, %v53
    %v55 = vrot.slane %v54, 2
    %v56 = vadd.f32 %v54, %v55
    %v57 = vrot.slane %v56, 1
    %v58 = vadd.f32 %v56, %v57
    %v59 = vmul.f32 %v51, 0.25
    %v60 = vmul.f32 %v58, 0.25
    %v61 = vsel %vm44, %v42, -inf
    %v62 = vrot.slane %v61, 4
    %v63 = vmax.f32 %v61, %v62
    %v64 = vrot.slane %v63, 2
    %v65 = vmax.f32 %v63, %v64
    %v66 = vrot.slane %v65, 1
    %v67 = vmax.f32 %v65, %v66
    %v68 = vsel %vm44, %v43, -inf
    %v69 = vrot.slane %v68, 4
    %v70 = vmax.f32 %v68, %v69
    %v71 = vrot.slane %v70, 2
    %v72 = vmax.f32 %v70, %v71
    %v73 = vrot.slane %v72, 1
    %v74 = vmax.f32 %v72, %v73
    %v77 = vrot.slane %v42, 4
    %v78 = vrot.slane %v43, 4
    %v81 = vsel %vm44, %v77, 0.0
    %v82 = vrot.slane %v81, 4
    %v83 = vadd.f32 %v81, %v82
    %v84 = vrot.slane %v83, 2
    %v85 = vadd.f32 %v83, %v84
    %v86 = vrot.slane %v85, 1
    %v87 = vadd.f32 %v85, %v86
    %v88 = vsel %vm44, %v78, 0.0
    %v89 = vrot.slane %v88, 4
    %v90 = vadd.f32 %v88, %v89
    %v91 = vrot.slane %v90, 2
    %v92 = vadd.f32 %v90, %v91
    %v93 = vrot.slane %v92, 1
    %v94 = vadd.f32 %v92, %v93
    %v95 = vmul.f32 %v87, 0.25
    %v96 = vmul.f32 %v94, 0.25
    %vm97 = vcmask 1047556
    %v98 = vsel %vm97, %v42, -inf
    %v99 = vrot.slane %v98, 4
    %v100 = vmax.f32 %v98, %v99
    %v101 = vrot.slane %v100, 2
    %v102 = vmax.f32 %v100, %v101
    %v103 = vrot.slane %v102, 1
    %v104 = vmax.f32 %v102, %v103
    %v105 = vsel %vm97, %v43, -inf
    %v106 = vrot.slane %v105, 4
    %v107 = vmax.f32 %v105, %v106
    %v108 = vrot.slane %v107, 2
    %v109 = vmax.f32 %v107, %v108
    %v110 = vrot.slane %v109, 1
    %v111 = vmax.f32 %v109, %v110
    %v116 = vrot.slane %v95, 7
    %v117 = vrot.slane %v96, 7
    %v118 = vrot.slane %v104, 7
    %v119 = vrot.slane %v111, 7
    %vm124 = vcmask 1040384
    %v125 = vsel %vm124, %v59, %v116
    %v126 = vsel %vm124, %v60, %v117
    %v127 = vsel %vm124, %v67, %v118
    %v128 = vsel %vm124, %v74, %v119
    %v129 = vld [vmem:[#allocation6] sm:$0xff]
    %v130 = vld [vmem:[#allocation6 + $0x8] sm:$0xff]
    %v131 = vld [vmem:[#allocation6 + $0x10] sm:$0xff]
    %v132 = vld [vmem:[#allocation6 + $0x18] sm:$0xff]
    %v133 = vld [vmem:[#allocation6 + $0x20] sm:$0xff]
    %v134 = vld [vmem:[#allocation6 + $0x28] sm:$0xff]
    %v135 = vld [vmem:[#allocation6 + $0x30] sm:$0xff]
    %v136 = vld [vmem:[#allocation6 + $0x38] sm:$0xff]
    %v137 = vld [vmem:[#allocation6 + $0x40] sm:$0xff]
    %v138 = vld [vmem:[#allocation6 + $0x48] sm:$0xff]
    %v139 = vld [vmem:[#allocation6 + $0x50] sm:$0xff]
    %v140 = vld [vmem:[#allocation6 + $0x58] sm:$0xff]
    %v141 = vld [vmem:[#allocation6 + $0x60] sm:$0xff]
    %v142 = vld [vmem:[#allocation6 + $0x68] sm:$0xff]
    %v143 = vld [vmem:[#allocation6 + $0x70] sm:$0xff]
    %v144 = vld [vmem:[#allocation6 + $0x78] sm:$0xff]
    %v145 = vld [vmem:[#allocation6 + $0x80] sm:$0xff]
    %v146 = vld [vmem:[#allocation6 + $0x88] sm:$0xff]
    %v147 = vld [vmem:[#allocation6 + $0x90] sm:$0xff]
    %v148 = vld [vmem:[#allocation6 + $0x98] sm:$0xff]
    %v149 = vld [vmem:[#allocation6 + $0xa0] sm:$0xff]
    %v150 = vld [vmem:[#allocation6 + $0xa8] sm:$0xff]
    %v151 = vld [vmem:[#allocation6 + $0xb0] sm:$0xff]
    %v152 = vld [vmem:[#allocation6 + $0xb8] sm:$0xff]
    %v153 = vld [vmem:[#allocation6 + $0xc0] sm:$0xff]
    %v154 = vld [vmem:[#allocation6 + $0xc8] sm:$0xff]
    %v155 = vld [vmem:[#allocation6 + $0xd0] sm:$0xff]
    %v156 = vld [vmem:[#allocation6 + $0xd8] sm:$0xff]
    %v157 = vld [vmem:[#allocation6 + $0xe0] sm:$0xff]
    %v158 = vld [vmem:[#allocation6 + $0xe8] sm:$0xff]
    %v159 = vld [vmem:[#allocation6 + $0xf0] sm:$0xff]
    %v160 = vld [vmem:[#allocation6 + $0xf8] sm:$0xff]
    %v161 = vld [vmem:[#allocation6 + $0x100] sm:$0xff]
    %v162 = vld [vmem:[#allocation6 + $0x108] sm:$0xff]
    %v163 = vld [vmem:[#allocation6 + $0x110] sm:$0xff]
    %v164 = vld [vmem:[#allocation6 + $0x118] sm:$0xff]
    %v165 = vld [vmem:[#allocation6 + $0x120] sm:$0xff]
    %v166 = vld [vmem:[#allocation6 + $0x128] sm:$0xff]
    %v167 = vld [vmem:[#allocation6 + $0x130] sm:$0xff]
    %v168 = vld [vmem:[#allocation6 + $0x138] sm:$0xff]
    %v169 = vld [vmem:[#allocation6 + $0x140] sm:$0xff]
    %v170 = vld [vmem:[#allocation6 + $0x148] sm:$0xff]
    %v171 = vld [vmem:[#allocation6 + $0x150] sm:$0xff]
    %v172 = vld [vmem:[#allocation6 + $0x158] sm:$0xff]
    %v173 = vld [vmem:[#allocation6 + $0x160] sm:$0xff]
    %v174 = vld [vmem:[#allocation6 + $0x168] sm:$0xff]
    %v175 = vld [vmem:[#allocation6 + $0x170] sm:$0xff]
    %v176 = vld [vmem:[#allocation6 + $0x178] sm:$0xff]
    %v177 = vld [vmem:[#allocation6 + $0x180] sm:$0xff]
    %v178 = vld [vmem:[#allocation6 + $0x188] sm:$0xff]
    %v179 = vld [vmem:[#allocation6 + $0x190] sm:$0xff]
    %v180 = vld [vmem:[#allocation6 + $0x198] sm:$0xff]
    %v181 = vld [vmem:[#allocation6 + $0x1a0] sm:$0xff]
    %v182 = vld [vmem:[#allocation6 + $0x1a8] sm:$0xff]
    %v183 = vld [vmem:[#allocation6 + $0x1b0] sm:$0xff]
    %v184 = vld [vmem:[#allocation6 + $0x1b8] sm:$0xff]
    %v185 = vld [vmem:[#allocation6 + $0x1c0] sm:$0xff]
    %v186 = vld [vmem:[#allocation6 + $0x1c8] sm:$0xff]
    %v187 = vld [vmem:[#allocation6 + $0x1d0] sm:$0xff]
    %v188 = vld [vmem:[#allocation6 + $0x1d8] sm:$0xff]
    %v189 = vld [vmem:[#allocation6 + $0x1e0] sm:$0xff]
    %v190 = vld [vmem:[#allocation6 + $0x1e8] sm:$0xff]
    %v191 = vld [vmem:[#allocation6 + $0x1f0] sm:$0xff]
    %v192 = vld [vmem:[#allocation6 + $0x1f8] sm:$0xff]
    %v193 = vld [vmem:[#allocation6 + $0x200] sm:$0xff]
    %v194 = vld [vmem:[#allocation6 + $0x208] sm:$0xff]
    %v195 = vld [vmem:[#allocation6 + $0x210] sm:$0xff]
    %v196 = vld [vmem:[#allocation6 + $0x218] sm:$0xff]
    %v197 = vld [vmem:[#allocation6 + $0x220] sm:$0xff]
    %v198 = vld [vmem:[#allocation6 + $0x228] sm:$0xff]
    %v199 = vld [vmem:[#allocation6 + $0x230] sm:$0xff]
    %v200 = vld [vmem:[#allocation6 + $0x238] sm:$0xff]
    %v201 = vld [vmem:[#allocation6 + $0x240] sm:$0xff]
    %v202 = vld [vmem:[#allocation6 + $0x248] sm:$0xff]
    %v203 = vld [vmem:[#allocation6 + $0x250] sm:$0xff]
    %v204 = vld [vmem:[#allocation6 + $0x258] sm:$0xff]
    %v205 = vld [vmem:[#allocation6 + $0x260] sm:$0xff]
    %v206 = vld [vmem:[#allocation6 + $0x268] sm:$0xff]
    %v207 = vld [vmem:[#allocation6 + $0x270] sm:$0xff]
    %v208 = vld [vmem:[#allocation6 + $0x278] sm:$0xff]
    %v209 = vld [vmem:[#allocation6 + $0x280] sm:$0xff]
    %v210 = vld [vmem:[#allocation6 + $0x288] sm:$0xff]
    %v211 = vld [vmem:[#allocation6 + $0x290] sm:$0xff]
    %v212 = vld [vmem:[#allocation6 + $0x298] sm:$0xff]
    %v213 = vld [vmem:[#allocation6 + $0x2a0] sm:$0xff]
    %v214 = vld [vmem:[#allocation6 + $0x2a8] sm:$0xff]
    %v215 = vld [vmem:[#allocation6 + $0x2b0] sm:$0xff]
    %v216 = vld [vmem:[#allocation6 + $0x2b8] sm:$0xff]
    %v217 = vld [vmem:[#allocation6 + $0x2c0] sm:$0xff]
    %v218 = vld [vmem:[#allocation6 + $0x2c8] sm:$0xff]
    %v219 = vld [vmem:[#allocation6 + $0x2d0] sm:$0xff]
    %v220 = vld [vmem:[#allocation6 + $0x2d8] sm:$0xff]
    %v221 = vld [vmem:[#allocation6 + $0x2e0] sm:$0xff]
    %v222 = vld [vmem:[#allocation6 + $0x2e8] sm:$0xff]
    %v223 = vld [vmem:[#allocation6 + $0x2f0] sm:$0xff]
    %v224 = vld [vmem:[#allocation6 + $0x2f8] sm:$0xff]
    %v225 = vld [vmem:[#allocation6 + $0x300] sm:$0xff]
    %v226 = vld [vmem:[#allocation6 + $0x308] sm:$0xff]
    %v227 = vld [vmem:[#allocation6 + $0x310] sm:$0xff]
    %v228 = vld [vmem:[#allocation6 + $0x318] sm:$0xff]
    %v229 = vld [vmem:[#allocation6 + $0x320] sm:$0xff]
    %v230 = vld [vmem:[#allocation6 + $0x328] sm:$0xff]
    %v231 = vld [vmem:[#allocation6 + $0x330] sm:$0xff]
    %v232 = vld [vmem:[#allocation6 + $0x338] sm:$0xff]
    %v233 = vld [vmem:[#allocation6 + $0x340] sm:$0xff]
    %v234 = vld [vmem:[#allocation6 + $0x348] sm:$0xff]
    %v235 = vld [vmem:[#allocation6 + $0x350] sm:$0xff]
    %v236 = vld [vmem:[#allocation6 + $0x358] sm:$0xff]
    %v237 = vld [vmem:[#allocation6 + $0x360] sm:$0xff]
    %v238 = vld [vmem:[#allocation6 + $0x368] sm:$0xff]
    %v239 = vld [vmem:[#allocation6 + $0x370] sm:$0xff]
    %v240 = vld [vmem:[#allocation6 + $0x378] sm:$0xff]
    %v241 = vld [vmem:[#allocation6 + $0x380] sm:$0xff]
    %v242 = vld [vmem:[#allocation6 + $0x388] sm:$0xff]
    %v243 = vld [vmem:[#allocation6 + $0x390] sm:$0xff]
    %v244 = vld [vmem:[#allocation6 + $0x398] sm:$0xff]
    %v245 = vld [vmem:[#allocation6 + $0x3a0] sm:$0xff]
    %v246 = vld [vmem:[#allocation6 + $0x3a8] sm:$0xff]
    %v247 = vld [vmem:[#allocation6 + $0x3b0] sm:$0xff]
    %v248 = vld [vmem:[#allocation6 + $0x3b8] sm:$0xff]
    %v249 = vld [vmem:[#allocation6 + $0x3c0] sm:$0xff]
    %v250 = vld [vmem:[#allocation6 + $0x3c8] sm:$0xff]
    %v251 = vld [vmem:[#allocation6 + $0x3d0] sm:$0xff]
    %v252 = vld [vmem:[#allocation6 + $0x3d8] sm:$0xff]
    %v253 = vld [vmem:[#allocation6 + $0x3e0] sm:$0xff]
    %v254 = vld [vmem:[#allocation6 + $0x3e8] sm:$0xff]
    %v255 = vld [vmem:[#allocation6 + $0x3f0] sm:$0xff]
    %v256 = vld [vmem:[#allocation6 + $0x3f8] sm:$0xff]
    %s257 = sld [smem:[#allocation2]]
    %v258 = vstv %s257
    %v259 = vand.u32 %v130, 4294901760
    %260 = vmatprep.subr.mxu0 %v259
    %v261 = vand.u32 %v129, 4294901760
    %262 = vmatpush1.msra.mxu0 %v261
    %v263 = vand.u32 %v132, 4294901760
    %264 = vmatprep.subr.mxu0 %v263
    %v265 = vand.u32 %v131, 4294901760
    %266 = vmatpush1.msra.mxu0 %v265
    %v267 = vand.u32 %v134, 4294901760
    %268 = vmatprep.subr.mxu0 %v267
    %v269 = vand.u32 %v133, 4294901760
    %270 = vmatpush1.msra.mxu0 %v269
    %v271 = vand.u32 %v136, 4294901760
    %272 = vmatprep.subr.mxu0 %v271
    %v273 = vand.u32 %v135, 4294901760
    %274 = vmatpush1.msra.mxu0 %v273
    %v275 = vand.u32 %v138, 4294901760
    %276 = vmatprep.subr.mxu0 %v275
    %v277 = vand.u32 %v137, 4294901760
    %278 = vmatpush1.msra.mxu0 %v277
    %v279 = vand.u32 %v140, 4294901760
    %280 = vmatprep.subr.mxu0 %v279
    %v281 = vand.u32 %v139, 4294901760
    %282 = vmatpush1.msra.mxu0 %v281
    %v283 = vand.u32 %v142, 4294901760
    %284 = vmatprep.subr.mxu0 %v283
    %v285 = vand.u32 %v141, 4294901760
    %286 = vmatpush1.msra.mxu0 %v285
    %v287 = vand.u32 %v144, 4294901760
    %288 = vmatprep.subr.mxu0 %v287
    %v289 = vand.u32 %v143, 4294901760
    %290 = vmatpush1.msra.mxu0 %v289
    %v291 = vand.u32 %v146, 4294901760
    %292 = vmatprep.subr.mxu0 %v291
    %v293 = vand.u32 %v145, 4294901760
    %294 = vmatpush1.msra.mxu0 %v293
    %v295 = vand.u32 %v148, 4294901760
    %296 = vmatprep.subr.mxu0 %v295
    %v297 = vand.u32 %v147, 4294901760
    %298 = vmatpush1.msra.mxu0 %v297
    %v299 = vand.u32 %v150, 4294901760
    %300 = vmatprep.subr.mxu0 %v299
    %v301 = vand.u32 %v149, 4294901760
    %302 = vmatpush1.msra.mxu0 %v301
    %v303 = vand.u32 %v152, 4294901760
    %304 = vmatprep.subr.mxu0 %v303
    %v305 = vand.u32 %v151, 4294901760
    %306 = vmatpush1.msra.mxu0 %v305
    %v307 = vand.u32 %v154, 4294901760
    %308 = vmatprep.subr.mxu0 %v307
    %v309 = vand.u32 %v153, 4294901760
    %310 = vmatpush1.msra.mxu0 %v309
    %v311 = vand.u32 %v156, 4294901760
    %312 = vmatprep.subr.mxu0 %v311
    %v313 = vand.u32 %v155, 4294901760
    %314 = vmatpush1.msra.mxu0 %v313
    %v315 = vand.u32 %v158, 4294901760
    %316 = vmatprep.subr.mxu0 %v315
    %v317 = vand.u32 %v157, 4294901760
    %318 = vmatpush1.msra.mxu0 %v317
    %v319 = vand.u32 %v160, 4294901760
    %320 = vmatprep.subr.mxu0 %v319
    %v321 = vand.u32 %v159, 4294901760
    %322 = vmatpush1.msra.mxu0 %v321
    %v323 = vand.u32 %v162, 4294901760
    %324 = vmatprep.subr.mxu0 %v323
    %v325 = vand.u32 %v161, 4294901760
    %326 = vmatpush1.msra.mxu0 %v325
    %v327 = vand.u32 %v164, 4294901760
    %328 = vmatprep.subr.mxu0 %v327
    %v329 = vand.u32 %v163, 4294901760
    %330 = vmatpush1.msra.mxu0 %v329
    %v331 = vand.u32 %v166, 4294901760
    %332 = vmatprep.subr.mxu0 %v331
    %v333 = vand.u32 %v165, 4294901760
    %334 = vmatpush1.msra.mxu0 %v333
    %v335 = vand.u32 %v168, 4294901760
    %336 = vmatprep.subr.mxu0 %v335
    %v337 = vand.u32 %v167, 4294901760
    %338 = vmatpush1.msra.mxu0 %v337
    %v339 = vand.u32 %v170, 4294901760
    %340 = vmatprep.subr.mxu0 %v339
    %v341 = vand.u32 %v169, 4294901760
    %342 = vmatpush1.msra.mxu0 %v341
    %v343 = vand.u32 %v172, 4294901760
    %344 = vmatprep.subr.mxu0 %v343
    %v345 = vand.u32 %v171, 4294901760
    %346 = vmatpush1.msra.mxu0 %v345
    %v347 = vand.u32 %v174, 4294901760
    %348 = vmatprep.subr.mxu0 %v347
    %v349 = vand.u32 %v173, 4294901760
    %350 = vmatpush1.msra.mxu0 %v349
    %v351 = vand.u32 %v176, 4294901760
    %352 = vmatprep.subr.mxu0 %v351
    %v353 = vand.u32 %v175, 4294901760
    %354 = vmatpush1.msra.mxu0 %v353
    %v355 = vand.u32 %v178, 4294901760
    %356 = vmatprep.subr.mxu0 %v355
    %v357 = vand.u32 %v177, 4294901760
    %358 = vmatpush1.msra.mxu0 %v357
    %v359 = vand.u32 %v180, 4294901760
    %360 = vmatprep.subr.mxu0 %v359
    %v361 = vand.u32 %v179, 4294901760
    %362 = vmatpush1.msra.mxu0 %v361
    %v363 = vand.u32 %v182, 4294901760
    %364 = vmatprep.subr.mxu0 %v363
    %v365 = vand.u32 %v181, 4294901760
    %366 = vmatpush1.msra.mxu0 %v365
    %v367 = vand.u32 %v184, 4294901760
    %368 = vmatprep.subr.mxu0 %v367
    %v369 = vand.u32 %v183, 4294901760
    %370 = vmatpush1.msra.mxu0 %v369
    %v371 = vand.u32 %v186, 4294901760
    %372 = vmatprep.subr.mxu0 %v371
    %v373 = vand.u32 %v185, 4294901760
    %374 = vmatpush1.msra.mxu0 %v373
    %v375 = vand.u32 %v188, 4294901760
    %376 = vmatprep.subr.mxu0 %v375
    %v377 = vand.u32 %v187, 4294901760
    %378 = vmatpush1.msra.mxu0 %v377
    %v379 = vand.u32 %v190, 4294901760
    %380 = vmatprep.subr.mxu0 %v379
    %v381 = vand.u32 %v189, 4294901760
    %382 = vmatpush1.msra.mxu0 %v381
    %v383 = vand.u32 %v192, 4294901760
    %384 = vmatprep.subr.mxu0 %v383
    %v385 = vand.u32 %v191, 4294901760
    %386 = vmatpush1.msra.mxu0 %v385
    %v387 = vand.u32 %v126, 4294901760
    %v388 = vsub.f32 %v126, %v387
    %v389 = vand.u32 %v388, 4294901760
    %v390 = vsub.f32 %v388, %v389
    %v391 = vand.u32 %v390, 4294901760
    %392 = vmatprep.mubr.f32.mxu0 %v391
    %v393 = vand.u32 %v125, 4294901760
    %v394 = vsub.f32 %v125, %v393
    %v395 = vand.u32 %v394, 4294901760
    %v396 = vsub.f32 %v394, %v395
    %v397 = vand.u32 %v396, 4294901760
    %398 = vmatmul.mubr.f32.gmra.mrb[0].mxu0 %v397
    %v399 = vpop.f32.mrb[0].mxu0
    %v400 = vadd.f32 %v258, %v399
    %v401 = vpop.f32.mrb[0].mxu0
    %v402 = vadd.f32 %v258, %v401
    %403 = vdwg.mxu0
    %v404 = vand.u32 %v130, 4294901760
    %v405 = vsub.f32 %v130, %v404
    %v406 = vand.u32 %v405, 4294901760
    %v407 = vsub.f32 %v405, %v406
    %v408 = vand.u32 %v407, 4294901760
    %409 = vmatprep.subr.mxu0 %v408
    %v410 = vand.u32 %v129, 4294901760
    %v411 = vsub.f32 %v129, %v410
    %v412 = vand.u32 %v411, 4294901760
    %v413 = vsub.f32 %v411, %v412
    %v414 = vand.u32 %v413, 4294901760
    %415 = vmatpush1.msra.mxu0 %v414
    %v416 = vand.u32 %v132, 4294901760
    %v417 = vsub.f32 %v132, %v416
    %v418 = vand.u32 %v417, 4294901760
    %v419 = vsub.f32 %v417, %v418
    %v420 = vand.u32 %v419, 4294901760
    %421 = vmatprep.subr.mxu0 %v420
    %v422 = vand.u32 %v131, 4294901760
    %v423 = vsub.f32 %v131, %v422
    %v424 = vand.u32 %v423, 4294901760
    %v425 = vsub.f32 %v423, %v424
    %v426 = vand.u32 %v425, 4294901760
    %427 = vmatpush1.msra.mxu0 %v426
    %v428 = vand.u32 %v134, 4294901760
    %v429 = vsub.f32 %v134, %v428
    %v430 = vand.u32 %v429, 4294901760
    %v431 = vsub.f32 %v429, %v430
    %v432 = vand.u32 %v431, 4294901760
    %433 = vmatprep.subr.mxu0 %v432
    %v434 = vand.u32 %v133, 4294901760
    %v435 = vsub.f32 %v133, %v434
    %v436 = vand.u32 %v435, 4294901760
    %v437 = vsub.f32 %v435, %v436
    %v438 = vand.u32 %v437, 4294901760
    %439 = vmatpush1.msra.mxu0 %v438
    %v440 = vand.u32 %v136, 4294901760
    %v441 = vsub.f32 %v136, %v440
    %v442 = vand.u32 %v441, 4294901760
    %v443 = vsub.f32 %v441, %v442
    %v444 = vand.u32 %v443, 4294901760
    %445 = vmatprep.subr.mxu0 %v444
    %v446 = vand.u32 %v135, 4294901760
    %v447 = vsub.f32 %v135, %v446
    %v448 = vand.u32 %v447, 4294901760
    %v449 = vsub.f32 %v447, %v448
    %v450 = vand.u32 %v449, 4294901760
    %451 = vmatpush1.msra.mxu0 %v450
    %v452 = vand.u32 %v138, 4294901760
    %v453 = vsub.f32 %v138, %v452
    %v454 = vand.u32 %v453, 4294901760
    %v455 = vsub.f32 %v453, %v454
    %v456 = vand.u32 %v455, 4294901760
    %457 = vmatprep.subr.mxu0 %v456
    %v458 = vand.u32 %v137, 4294901760
    %v459 = vsub.f32 %v137, %v458
    %v460 = vand.u32 %v459, 4294901760
    %v461 = vsub.f32 %v459, %v460
    %v462 = vand.u32 %v461, 4294901760
    %463 = vmatpush1.msra.mxu0 %v462
    %v464 = vand.u32 %v140, 4294901760
    %v465 = vsub.f32 %v140, %v464
    %v466 = vand.u32 %v465, 4294901760
    %v467 = vsub.f32 %v465, %v466
    %v468 = vand.u32 %v467, 4294901760
    %469 = vmatprep.subr.mxu0 %v468
    %v470 = vand.u32 %v139, 4294901760
    %v471 = vsub.f32 %v139, %v470
    %v472 = vand.u32 %v471, 4294901760
    %v473 = vsub.f32 %v471, %v472
    %v474 = vand.u32 %v473, 4294901760
    %475 = vmatpush1.msra.mxu0 %v474
    %v476 = vand.u32 %v142, 4294901760
    %v477 = vsub.f32 %v142, %v476
    %v478 = vand.u32 %v477, 4294901760
    %v479 = vsub.f32 %v477, %v478
    %v480 = vand.u32 %v479, 4294901760
    %481 = vmatprep.subr.mxu0 %v480
    %v482 = vand.u32 %v141, 4294901760
    %v483 = vsub.f32 %v141, %v482
    %v484 = vand.u32 %v483, 4294901760
    %v485 = vsub.f32 %v483, %v484
    %v486 = vand.u32 %v485, 4294901760
    %487 = vmatpush1.msra.mxu0 %v486
    %v488 = vand.u32 %v144, 4294901760
    %v489 = vsub.f32 %v144, %v488
    %v490 = vand.u32 %v489, 4294901760
    %v491 = vsub.f32 %v489, %v490
    %v492 = vand.u32 %v491, 4294901760
    %493 = vmatprep.subr.mxu0 %v492
    %v494 = vand.u32 %v143, 4294901760
    %v495 = vsub.f32 %v143, %v494
    %v496 = vand.u32 %v495, 4294901760
    %v497 = vsub.f32 %v495, %v496
    %v498 = vand.u32 %v497, 4294901760
    %499 = vmatpush1.msra.mxu0 %v498
    %v500 = vand.u32 %v146, 4294901760
    %v501 = vsub.f32 %v146, %v500
    %v502 = vand.u32 %v501, 4294901760
    %v503 = vsub.f32 %v501, %v502
    %v504 = vand.u32 %v503, 4294901760
    %505 = vmatprep.subr.mxu0 %v504
    %v506 = vand.u32 %v145, 4294901760
    %v507 = vsub.f32 %v145, %v506
    %v508 = vand.u32 %v507, 4294901760
    %v509 = vsub.f32 %v507, %v508
    %v510 = vand.u32 %v509, 4294901760
    %511 = vmatpush1.msra.mxu0 %v510
    %v512 = vand.u32 %v148, 4294901760
    %v513 = vsub.f32 %v148, %v512
    %v514 = vand.u32 %v513, 4294901760
    %v515 = vsub.f32 %v513, %v514
    %v516 = vand.u32 %v515, 4294901760
    %517 = vmatprep.subr.mxu0 %v516
    %v518 = vand.u32 %v147, 4294901760
    %v519 = vsub.f32 %v147, %v518
    %v520 = vand.u32 %v519, 4294901760
    %v521 = vsub.f32 %v519, %v520
    %v522 = vand.u32 %v521, 4294901760
    %523 = vmatpush1.msra.mxu0 %v522
    %v524 = vand.u32 %v150, 4294901760
    %v525 = vsub.f32 %v150, %v524
    %v526 = vand.u32 %v525, 4294901760
    %v527 = vsub.f32 %v525, %v526
    %v528 = vand.u32 %v527, 4294901760
    %529 = vmatprep.subr.mxu0 %v528
    %v530 = vand.u32 %v149, 4294901760
    %v531 = vsub.f32 %v149, %v530
    %v532 = vand.u32 %v531, 4294901760
    %v533 = vsub.f32 %v531, %v532
    %v534 = vand.u32 %v533, 4294901760
    %535 = vmatpush1.msra.mxu0 %v534
    %v536 = vand.u32 %v152, 4294901760
    %v537 = vsub.f32 %v152, %v536
    %v538 = vand.u32 %v537, 4294901760
    %v539 = vsub.f32 %v537, %v538
    %v540 = vand.u32 %v539, 4294901760
    %541 = vmatprep.subr.mxu0 %v540
    %v542 = vand.u32 %v151, 4294901760
    %v543 = vsub.f32 %v151, %v542
    %v544 = vand.u32 %v543, 4294901760
    %v545 = vsub.f32 %v543, %v544
    %v546 = vand.u32 %v545, 4294901760
    %547 = vmatpush1.msra.mxu0 %v546
    %v548 = vand.u32 %v154, 4294901760
    %v549 = vsub.f32 %v154, %v548
    %v550 = vand.u32 %v549, 4294901760
    %v551 = vsub.f32 %v549, %v550
    %v552 = vand.u32 %v551, 4294901760
    %553 = vmatprep.subr.mxu0 %v552
    %v554 = vand.u32 %v153, 4294901760
    %v555 = vsub.f32 %v153, %v554
    %v556 = vand.u32 %v555, 4294901760
    %v557 = vsub.f32 %v555, %v556
    %v558 = vand.u32 %v557, 4294901760
    %559 = vmatpush1.msra.mxu0 %v558
    %v560 = vand.u32 %v156, 4294901760
    %v561 = vsub.f32 %v156, %v560
    %v562 = vand.u32 %v561, 4294901760
    %v563 = vsub.f32 %v561, %v562
    %v564 = vand.u32 %v563, 4294901760
    %565 = vmatprep.subr.mxu0 %v564
    %v566 = vand.u32 %v155, 4294901760
    %v567 = vsub.f32 %v155, %v566
    %v568 = vand.u32 %v567, 4294901760
    %v569 = vsub.f32 %v567, %v568
    %v570 = vand.u32 %v569, 4294901760
    %571 = vmatpush1.msra.mxu0 %v570
    %v572 = vand.u32 %v158, 4294901760
    %v573 = vsub.f32 %v158, %v572
    %v574 = vand.u32 %v573, 4294901760
    %v575 = vsub.f32 %v573, %v574
    %v576 = vand.u32 %v575, 4294901760
    %577 = vmatprep.subr.mxu0 %v576
    %v578 = vand.u32 %v157, 4294901760
    %v579 = vsub.f32 %v157, %v578
    %v580 = vand.u32 %v579, 4294901760
    %v581 = vsub.f32 %v579, %v580
    %v582 = vand.u32 %v581, 4294901760
    %583 = vmatpush1.msra.mxu0 %v582
    %v584 = vand.u32 %v160, 4294901760
    %v585 = vsub.f32 %v160, %v584
    %v586 = vand.u32 %v585, 4294901760
    %v587 = vsub.f32 %v585, %v586
    %v588 = vand.u32 %v587, 4294901760
    %589 = vmatprep.subr.mxu0 %v588
    %v590 = vand.u32 %v159, 4294901760
    %v591 = vsub.f32 %v159, %v590
    %v592 = vand.u32 %v591, 4294901760
    %v593 = vsub.f32 %v591, %v592
    %v594 = vand.u32 %v593, 4294901760
    %595 = vmatpush1.msra.mxu0 %v594
    %v596 = vand.u32 %v162, 4294901760
    %v597 = vsub.f32 %v162, %v596
    %v598 = vand.u32 %v597, 4294901760
    %v599 = vsub.f32 %v597, %v598
    %v600 = vand.u32 %v599, 4294901760
    %601 = vmatprep.subr.mxu0 %v600
    %v602 = vand.u32 %v161, 4294901760
    %v603 = vsub.f32 %v161, %v602
    %v604 = vand.u32 %v603, 4294901760
    %v605 = vsub.f32 %v603, %v604
    %v606 = vand.u32 %v605, 4294901760
    %607 = vmatpush1.msra.mxu0 %v606
    %v608 = vand.u32 %v164, 4294901760
    %v609 = vsub.f32 %v164, %v608
    %v610 = vand.u32 %v609, 4294901760
    %v611 = vsub.f32 %v609, %v610
    %v612 = vand.u32 %v611, 4294901760
    %613 = vmatprep.subr.mxu0 %v612
    %v614 = vand.u32 %v163, 4294901760
    %v615 = vsub.f32 %v163, %v614
    %v616 = vand.u32 %v615, 4294901760
    %v617 = vsub.f32 %v615, %v616
    %v618 = vand.u32 %v617, 4294901760
    %619 = vmatpush1.msra.mxu0 %v618
    %v620 = vand.u32 %v166, 4294901760
    %v621 = vsub.f32 %v166, %v620
    %v622 = vand.u32 %v621, 4294901760
    %v623 = vsub.f32 %v621, %v622
    %v624 = vand.u32 %v623, 4294901760
    %625 = vmatprep.subr.mxu0 %v624
    %v626 = vand.u32 %v165, 4294901760
    %v627 = vsub.f32 %v165, %v626
    %v628 = vand.u32 %v627, 4294901760
    %v629 = vsub.f32 %v627, %v628
    %v630 = vand.u32 %v629, 4294901760
    %631 = vmatpush1.msra.mxu0 %v630
    %v632 = vand.u32 %v168, 4294901760
    %v633 = vsub.f32 %v168, %v632
    %v634 = vand.u32 %v633, 4294901760
    %v635 = vsub.f32 %v633, %v634
    %v636 = vand.u32 %v635, 4294901760
    %637 = vmatprep.subr.mxu0 %v636
    %v638 = vand.u32 %v167, 4294901760
    %v639 = vsub.f32 %v167, %v638
    %v640 = vand.u32 %v639, 4294901760
    %v641 = vsub.f32 %v639, %v640
    %v642 = vand.u32 %v641, 4294901760
    %643 = vmatpush1.msra.mxu0 %v642
    %v644 = vand.u32 %v170, 4294901760
    %v645 = vsub.f32 %v170, %v644
    %v646 = vand.u32 %v645, 4294901760
    %v647 = vsub.f32 %v645, %v646
    %v648 = vand.u32 %v647, 4294901760
    %649 = vmatprep.subr.mxu0 %v648
    %v650 = vand.u32 %v169, 4294901760
    %v651 = vsub.f32 %v169, %v650
    %v652 = vand.u32 %v651, 4294901760
    %v653 = vsub.f32 %v651, %v652
    %v654 = vand.u32 %v653, 4294901760
    %655 = vmatpush1.msra.mxu0 %v654
    %v656 = vand.u32 %v172, 4294901760
    %v657 = vsub.f32 %v172, %v656
    %v658 = vand.u32 %v657, 4294901760
    %v659 = vsub.f32 %v657, %v658
    %v660 = vand.u32 %v659, 4294901760
    %661 = vmatprep.subr.mxu0 %v660
    %v662 = vand.u32 %v171, 4294901760
    %v663 = vsub.f32 %v171, %v662
    %v664 = vand.u32 %v663, 4294901760
    %v665 = vsub.f32 %v663, %v664
    %v666 = vand.u32 %v665, 4294901760
    %667 = vmatpush1.msra.mxu0 %v666
    %v668 = vand.u32 %v174, 4294901760
    %v669 = vsub.f32 %v174, %v668
    %v670 = vand.u32 %v669, 4294901760
    %v671 = vsub.f32 %v669, %v670
    %v672 = vand.u32 %v671, 4294901760
    %673 = vmatprep.subr.mxu0 %v672
    %v674 = vand.u32 %v173, 4294901760
    %v675 = vsub.f32 %v173, %v674
    %v676 = vand.u32 %v675, 4294901760
    %v677 = vsub.f32 %v675, %v676
    %v678 = vand.u32 %v677, 4294901760
    %679 = vmatpush1.msra.mxu0 %v678
    %v680 = vand.u32 %v176, 4294901760
    %v681 = vsub.f32 %v176, %v680
    %v682 = vand.u32 %v681, 4294901760
    %v683 = vsub.f32 %v681, %v682
    %v684 = vand.u32 %v683, 4294901760
    %685 = vmatprep.subr.mxu0 %v684
    %v686 = vand.u32 %v175, 4294901760
    %v687 = vsub.f32 %v175, %v686
    %v688 = vand.u32 %v687, 4294901760
    %v689 = vsub.f32 %v687, %v688
    %v690 = vand.u32 %v689, 4294901760
    %691 = vmatpush1.msra.mxu0 %v690
    %v692 = vand.u32 %v178, 4294901760
    %v693 = vsub.f32 %v178, %v692
    %v694 = vand.u32 %v693, 4294901760
    %v695 = vsub.f32 %v693, %v694
    %v696 = vand.u32 %v695, 4294901760
    %697 = vmatprep.subr.mxu0 %v696
    %v698 = vand.u32 %v177, 4294901760
    %v699 = vsub.f32 %v177, %v698
    %v700 = vand.u32 %v699, 4294901760
    %v701 = vsub.f32 %v699, %v700
    %v702 = vand.u32 %v701, 4294901760
    %703 = vmatpush1.msra.mxu0 %v702
    %v704 = vand.u32 %v180, 4294901760
    %v705 = vsub.f32 %v180, %v704
    %v706 = vand.u32 %v705, 4294901760
    %v707 = vsub.f32 %v705, %v706
    %v708 = vand.u32 %v707, 4294901760
    %709 = vmatprep.subr.mxu0 %v708
    %v710 = vand.u32 %v179, 4294901760
    %v711 = vsub.f32 %v179, %v710
    %v712 = vand.u32 %v711, 4294901760
    %v713 = vsub.f32 %v711, %v712
    %v714 = vand.u32 %v713, 4294901760
    %715 = vmatpush1.msra.mxu0 %v714
    %v716 = vand.u32 %v182, 4294901760
    %v717 = vsub.f32 %v182, %v716
    %v718 = vand.u32 %v717, 4294901760
    %v719 = vsub.f32 %v717, %v718
    %v720 = vand.u32 %v719, 4294901760
    %721 = vmatprep.subr.mxu0 %v720
    %v722 = vand.u32 %v181, 4294901760
    %v723 = vsub.f32 %v181, %v722
    %v724 = vand.u32 %v723, 4294901760
    %v725 = vsub.f32 %v723, %v724
    %v726 = vand.u32 %v725, 4294901760
    %727 = vmatpush1.msra.mxu0 %v726
    %v728 = vand.u32 %v184, 4294901760
    %v729 = vsub.f32 %v184, %v728
    %v730 = vand.u32 %v729, 4294901760
    %v731 = vsub.f32 %v729, %v730
    %v732 = vand.u32 %v731, 4294901760
    %733 = vmatprep.subr.mxu0 %v732
    %v734 = vand.u32 %v183, 4294901760
    %v735 = vsub.f32 %v183, %v734
    %v736 = vand.u32 %v735, 4294901760
    %v737 = vsub.f32 %v735, %v736
    %v738 = vand.u32 %v737, 4294901760
    %739 = vmatpush1.msra.mxu0 %v738
    %v740 = vand.u32 %v186, 4294901760
    %v741 = vsub.f32 %v186, %v740
    %v742 = vand.u32 %v741, 4294901760
    %v743 = vsub.f32 %v741, %v742
    %v744 = vand.u32 %v743, 4294901760
    %745 = vmatprep.subr.mxu0 %v744
    %v746 = vand.u32 %v185, 4294901760
    %v747 = vsub.f32 %v185, %v746
    %v748 = vand.u32 %v747, 4294901760
    %v749 = vsub.f32 %v747, %v748
    %v750 = vand.u32 %v749, 4294901760
    %751 = vmatpush1.msra.mxu0 %v750
    %v752 = vand.u32 %v188, 4294901760
    %v753 = vsub.f32 %v188, %v752
    %v754 = vand.u32 %v753, 4294901760
    %v755 = vsub.f32 %v753, %v754
    %v756 = vand.u32 %v755, 4294901760
    %757 = vmatprep.subr.mxu0 %v756
    %v758 = vand.u32 %v187, 4294901760
    %v759 = vsub.f32 %v187, %v758
    %v760 = vand.u32 %v759, 4294901760
    %v761 = vsub.f32 %v759, %v760
    %v762 = vand.u32 %v761, 4294901760
    %763 = vmatpush1.msra.mxu0 %v762
    %v764 = vand.u32 %v190, 4294901760
    %v765 = vsub.f32 %v190, %v764
    %v766 = vand.u32 %v765, 4294901760
    %v767 = vsub.f32 %v765, %v766
    %v768 = vand.u32 %v767, 4294901760
    %769 = vmatprep.subr.mxu0 %v768
    %v770 = vand.u32 %v189, 4294901760
    %v771 = vsub.f32 %v189, %v770
    %v772 = vand.u32 %v771, 4294901760
    %v773 = vsub.f32 %v771, %v772
    %v774 = vand.u32 %v773, 4294901760
    %775 = vmatpush1.msra.mxu0 %v774
    %v776 = vand.u32 %v192, 4294901760
    %v777 = vsub.f32 %v192, %v776
    %v778 = vand.u32 %v777, 4294901760
    %v779 = vsub.f32 %v777, %v778
    %v780 = vand.u32 %v779, 4294901760
    %781 = vmatprep.subr.mxu0 %v780
    %v782 = vand.u32 %v191, 4294901760
    %v783 = vsub.f32 %v191, %v782
    %v784 = vand.u32 %v783, 4294901760
    %v785 = vsub.f32 %v783, %v784
    %v786 = vand.u32 %v785, 4294901760
    %787 = vmatpush1.msra.mxu0 %v786
    %v788 = vand.u32 %v126, 4294901760
    %789 = vmatprep.mubr.f32.mxu0 %v788
    %v790 = vand.u32 %v125, 4294901760
    %791 = vmatmul.mubr.f32.gmra.mrb[0].mxu0 %v790
    %v792 = vpop.f32.mrb[0].mxu0
    %v793 = vadd.f32 %v400, %v792
    %v794 = vpop.f32.mrb[0].mxu0
    %v795 = vadd.f32 %v402, %v794
    %796 = vdwg.mxu0
    %v797 = vand.u32 %v130, 4294901760
    %v798 = vsub.f32 %v130, %v797
    %799 = vmatprep.subr.mxu0 %v798
    %v800 = vand.u32 %v129, 4294901760
    %v801 = vsub.f32 %v129, %v800
    %802 = vmatpush1.msra.mxu0 %v801
    %v803 = vand.u32 %v132, 4294901760
    %v804 = vsub.f32 %v132, %v803
    %805 = vmatprep.subr.mxu0 %v804
    %v806 = vand.u32 %v131, 4294901760
    %v807 = vsub.f32 %v131, %v806
    %808 = vmatpush1.msra.mxu0 %v807
    %v809 = vand.u32 %v134, 4294901760
    %v810 = vsub.f32 %v134, %v809
    %811 = vmatprep.subr.mxu0 %v810
    %v812 = vand.u32 %v133, 4294901760
    %v813 = vsub.f32 %v133, %v812
    %814 = vmatpush1.msra.mxu0 %v813
    %v815 = vand.u32 %v136, 4294901760
    %v816 = vsub.f32 %v136, %v815
    %817 = vmatprep.subr.mxu0 %v816
    %v818 = vand.u32 %v135, 4294901760
    %v819 = vsub.f32 %v135, %v818
    %820 = vmatpush1.msra.mxu0 %v819
    %v821 = vand.u32 %v138, 4294901760
    %v822 = vsub.f32 %v138, %v821
    %823 = vmatprep.subr.mxu0 %v822
    %v824 = vand.u32 %v137, 4294901760
    %v825 = vsub.f32 %v137, %v824
    %826 = vmatpush1.msra.mxu0 %v825
    %v827 = vand.u32 %v140, 4294901760
    %v828 = vsub.f32 %v140, %v827
    %829 = vmatprep.subr.mxu0 %v828
    %v830 = vand.u32 %v139, 4294901760
    %v831 = vsub.f32 %v139, %v830
    %832 = vmatpush1.msra.mxu0 %v831
    %v833 = vand.u32 %v142, 4294901760
    %v834 = vsub.f32 %v142, %v833
    %835 = vmatprep.subr.mxu0 %v834
    %v836 = vand.u32 %v141, 4294901760
    %v837 = vsub.f32 %v141, %v836
    %838 = vmatpush1.msra.mxu0 %v837
    %v839 = vand.u32 %v144, 4294901760
    %v840 = vsub.f32 %v144, %v839
    %841 = vmatprep.subr.mxu0 %v840
    %v842 = vand.u32 %v143, 4294901760
    %v843 = vsub.f32 %v143, %v842
    %844 = vmatpush1.msra.mxu0 %v843
    %v845 = vand.u32 %v146, 4294901760
    %v846 = vsub.f32 %v146, %v845
    %847 = vmatprep.subr.mxu0 %v846
    %v848 = vand.u32 %v145, 4294901760
    %v849 = vsub.f32 %v145, %v848
    %850 = vmatpush1.msra.mxu0 %v849
    %v851 = vand.u32 %v148, 4294901760
    %v852 = vsub.f32 %v148, %v851
    %853 = vmatprep.subr.mxu0 %v852
    %v854 = vand.u32 %v147, 4294901760
    %v855 = vsub.f32 %v147, %v854
    %856 = vmatpush1.msra.mxu0 %v855
    %v857 = vand.u32 %v150, 4294901760
    %v858 = vsub.f32 %v150, %v857
    %859 = vmatprep.subr.mxu0 %v858
    %v860 = vand.u32 %v149, 4294901760
    %v861 = vsub.f32 %v149, %v860
    %862 = vmatpush1.msra.mxu0 %v861
    %v863 = vand.u32 %v152, 4294901760
    %v864 = vsub.f32 %v152, %v863
    %865 = vmatprep.subr.mxu0 %v864
    %v866 = vand.u32 %v151, 4294901760
    %v867 = vsub.f32 %v151, %v866
    %868 = vmatpush1.msra.mxu0 %v867
    %v869 = vand.u32 %v154, 4294901760
    %v870 = vsub.f32 %v154, %v869
    %871 = vmatprep.subr.mxu0 %v870
    %v872 = vand.u32 %v153, 4294901760
    %v873 = vsub.f32 %v153, %v872
    %874 = vmatpush1.msra.mxu0 %v873
    %v875 = vand.u32 %v156, 4294901760
    %v876 = vsub.f32 %v156, %v875
    %877 = vmatprep.subr.mxu0 %v876
    %v878 = vand.u32 %v155, 4294901760
    %v879 = vsub.f32 %v155, %v878
    %880 = vmatpush1.msra.mxu0 %v879
    %v881 = vand.u32 %v158, 4294901760
    %v882 = vsub.f32 %v158, %v881
    %883 = vmatprep.subr.mxu0 %v882
    %v884 = vand.u32 %v157, 4294901760
    %v885 = vsub.f32 %v157, %v884
    %886 = vmatpush1.msra.mxu0 %v885
    %v887 = vand.u32 %v160, 4294901760
    %v888 = vsub.f32 %v160, %v887
    %889 = vmatprep.subr.mxu0 %v888
    %v890 = vand.u32 %v159, 4294901760
    %v891 = vsub.f32 %v159, %v890
    %892 = vmatpush1.msra.mxu0 %v891
    %v893 = vand.u32 %v162, 4294901760
    %v894 = vsub.f32 %v162, %v893
    %895 = vmatprep.subr.mxu0 %v894
    %v896 = vand.u32 %v161, 4294901760
    %v897 = vsub.f32 %v161, %v896
    %898 = vmatpush1.msra.mxu0 %v897
    %v899 = vand.u32 %v164, 4294901760
    %v900 = vsub.f32 %v164, %v899
    %901 = vmatprep.subr.mxu0 %v900
    %v902 = vand.u32 %v163, 4294901760
    %v903 = vsub.f32 %v163, %v902
    %904 = vmatpush1.msra.mxu0 %v903
    %v905 = vand.u32 %v166, 4294901760
    %v906 = vsub.f32 %v166, %v905
    %907 = vmatprep.subr.mxu0 %v906
    %v908 = vand.u32 %v165, 4294901760
    %v909 = vsub.f32 %v165, %v908
    %910 = vmatpush1.msra.mxu0 %v909
    %v911 = vand.u32 %v168, 4294901760
    %v912 = vsub.f32 %v168, %v911
    %913 = vmatprep.subr.mxu0 %v912
    %v914 = vand.u32 %v167, 4294901760
    %v915 = vsub.f32 %v167, %v914
    %916 = vmatpush1.msra.mxu0 %v915
    %v917 = vand.u32 %v170, 4294901760
    %v918 = vsub.f32 %v170, %v917
    %919 = vmatprep.subr.mxu0 %v918
    %v920 = vand.u32 %v169, 4294901760
    %v921 = vsub.f32 %v169, %v920
    %922 = vmatpush1.msra.mxu0 %v921
    %v923 = vand.u32 %v172, 4294901760
    %v924 = vsub.f32 %v172, %v923
    %925 = vmatprep.subr.mxu0 %v924
    %v926 = vand.u32 %v171, 4294901760
    %v927 = vsub.f32 %v171, %v926
    %928 = vmatpush1.msra.mxu0 %v927
    %v929 = vand.u32 %v174, 4294901760
    %v930 = vsub.f32 %v174, %v929
    %931 = vmatprep.subr.mxu0 %v930
    %v932 = vand.u32 %v173, 4294901760
    %v933 = vsub.f32 %v173, %v932
    %934 = vmatpush1.msra.mxu0 %v933
    %v935 = vand.u32 %v176, 4294901760
    %v936 = vsub.f32 %v176, %v935
    %937 = vmatprep.subr.mxu0 %v936
    %v938 = vand.u32 %v175, 4294901760
    %v939 = vsub.f32 %v175, %v938
    %940 = vmatpush1.msra.mxu0 %v939
    %v941 = vand.u32 %v178, 4294901760
    %v942 = vsub.f32 %v178, %v941
    %943 = vmatprep.subr.mxu0 %v942
    %v944 = vand.u32 %v177, 4294901760
    %v945 = vsub.f32 %v177, %v944
    %946 = vmatpush1.msra.mxu0 %v945
    %v947 = vand.u32 %v180, 4294901760
    %v948 = vsub.f32 %v180, %v947
    %949 = vmatprep.subr.mxu0 %v948
    %v950 = vand.u32 %v179, 4294901760
    %v951 = vsub.f32 %v179, %v950
    %952 = vmatpush1.msra.mxu0 %v951
    %v953 = vand.u32 %v182, 4294901760
    %v954 = vsub.f32 %v182, %v953
    %955 = vmatprep.subr.mxu0 %v954
    %v956 = vand.u32 %v181, 4294901760
    %v957 = vsub.f32 %v181, %v956
    %958 = vmatpush1.msra.mxu0 %v957
    %v959 = vand.u32 %v184, 4294901760
    %v960 = vsub.f32 %v184, %v959
    %961 = vmatprep.subr.mxu0 %v960
    %v962 = vand.u32 %v183, 4294901760
    %v963 = vsub.f32 %v183, %v962
    %964 = vmatpush1.msra.mxu0 %v963
    %v965 = vand.u32 %v186, 4294901760
    %v966 = vsub.f32 %v186, %v965
    %967 = vmatprep.subr.mxu0 %v966
    %v968 = vand.u32 %v185, 4294901760
    %v969 = vsub.f32 %v185, %v968
    %970 = vmatpush1.msra.mxu0 %v969
    %v971 = vand.u32 %v188, 4294901760
    %v972 = vsub.f32 %v188, %v971
    %973 = vmatprep.subr.mxu0 %v972
    %v974 = vand.u32 %v187, 4294901760
    %v975 = vsub.f32 %v187, %v974
    %976 = vmatpush1.msra.mxu0 %v975
    %v977 = vand.u32 %v190, 4294901760
    %v978 = vsub.f32 %v190, %v977
    %979 = vmatprep.subr.mxu0 %v978
    %v980 = vand.u32 %v189, 4294901760
    %v981 = vsub.f32 %v189, %v980
    %982 = vmatpush1.msra.mxu0 %v981
    %v983 = vand.u32 %v192, 4294901760
    %v984 = vsub.f32 %v192, %v983
    %985 = vmatprep.subr.mxu0 %v984
    %v986 = vand.u32 %v191, 4294901760
    %v987 = vsub.f32 %v191, %v986
    %988 = vmatpush1.msra.mxu0 %v987
    %v989 = vand.u32 %v126, 4294901760
    %v990 = vsub.f32 %v126, %v989
    %991 = vmatprep.mubr.f32.mxu0 %v990
    %v992 = vand.u32 %v125, 4294901760
    %v993 = vsub.f32 %v125, %v992
    %994 = vmatmul.mubr.f32.gmra.mrb[0].mxu0 %v993
    %v995 = vpop.f32.mrb[0].mxu0
    %v996 = vadd.f32 %v793, %v995
    %v997 = vpop.f32.mrb[0].mxu0
    %v998 = vadd.f32 %v795, %v997
    %999 = vdwg.mxu0
    %v1000 = vand.u32 %v130, 4294901760
    %1001 = vmatprep.subr.mxu0 %v1000
    %v1002 = vand.u32 %v129, 4294901760
    %1003 = vmatpush1.msra.mxu0 %v1002
    %v1004 = vand.u32 %v132, 4294901760
    %1005 = vmatprep.subr.mxu0 %v1004
    %v1006 = vand.u32 %v131, 4294901760
    %1007 = vmatpush1.msra.mxu0 %v1006
    %v1008 = vand.u32 %v134, 4294901760
    %1009 = vmatprep.subr.mxu0 %v1008
    %v1010 = vand.u32 %v133, 4294901760
    %1011 = vmatpush1.msra.mxu0 %v1010
    %v1012 = vand.u32 %v136, 4294901760
    %1013 = vmatprep.subr.mxu0 %v1012
    %v1014 = vand.u32 %v135, 4294901760
    %1015 = vmatpush1.msra.mxu0 %v1014
    %v1016 = vand.u32 %v138, 4294901760
    %1017 = vmatprep.subr.mxu0 %v1016
    %v1018 = vand.u32 %v137, 4294901760
    %1019 = vmatpush1.msra.mxu0 %v1018
    %v1020 = vand.u32 %v140, 4294901760
    %1021 = vmatprep.subr.mxu0 %v1020
    %v1022 = vand.u32 %v139, 4294901760
    %1023 = vmatpush1.msra.mxu0 %v1022
    %v1024 = vand.u32 %v142, 4294901760
    %1025 = vmatprep.subr.mxu0 %v1024
    %v1026 = vand.u32 %v141, 4294901760
    %1027 = vmatpush1.msra.mxu0 %v1026
    %v1028 = vand.u32 %v144, 4294901760
    %1029 = vmatprep.subr.mxu0 %v1028
    %v1030 = vand.u32 %v143, 4294901760
    %1031 = vmatpush1.msra.mxu0 %v1030
    %v1032 = vand.u32 %v146, 4294901760
    %1033 = vmatprep.subr.mxu0 %v1032
    %v1034 = vand.u32 %v145, 4294901760
    %1035 = vmatpush1.msra.mxu0 %v1034
    %v1036 = vand.u32 %v148, 4294901760
    %1037 = vmatprep.subr.mxu0 %v1036
    %v1038 = vand.u32 %v147, 4294901760
    %1039 = vmatpush1.msra.mxu0 %v1038
    %v1040 = vand.u32 %v150, 4294901760
    %1041 = vmatprep.subr.mxu0 %v1040
    %v1042 = vand.u32 %v149, 4294901760
    %1043 = vmatpush1.msra.mxu0 %v1042
    %v1044 = vand.u32 %v152, 4294901760
    %1045 = vmatprep.subr.mxu0 %v1044
    %v1046 = vand.u32 %v151, 4294901760
    %1047 = vmatpush1.msra.mxu0 %v1046
    %v1048 = vand.u32 %v154, 4294901760
    %1049 = vmatprep.subr.mxu0 %v1048
    %v1050 = vand.u32 %v153, 4294901760
    %1051 = vmatpush1.msra.mxu0 %v1050
    %v1052 = vand.u32 %v156, 4294901760
    %1053 = vmatprep.subr.mxu0 %v1052
    %v1054 = vand.u32 %v155, 4294901760
    %1055 = vmatpush1.msra.mxu0 %v1054
    %v1056 = vand.u32 %v158, 4294901760
    %1057 = vmatprep.subr.mxu0 %v1056
    %v1058 = vand.u32 %v157, 4294901760
    %1059 = vmatpush1.msra.mxu0 %v1058
    %v1060 = vand.u32 %v160, 4294901760
    %1061 = vmatprep.subr.mxu0 %v1060
    %v1062 = vand.u32 %v159, 4294901760
    %1063 = vmatpush1.msra.mxu0 %v1062
    %v1064 = vand.u32 %v162, 4294901760
    %1065 = vmatprep.subr.mxu0 %v1064
    %v1066 = vand.u32 %v161, 4294901760
    %1067 = vmatpush1.msra.mxu0 %v1066
    %v1068 = vand.u32 %v164, 4294901760
    %1069 = vmatprep.subr.mxu0 %v1068
    %v1070 = vand.u32 %v163, 4294901760
    %1071 = vmatpush1.msra.mxu0 %v1070
    %v1072 = vand.u32 %v166, 4294901760
    %1073 = vmatprep.subr.mxu0 %v1072
    %v1074 = vand.u32 %v165, 4294901760
    %1075 = vmatpush1.msra.mxu0 %v1074
    %v1076 = vand.u32 %v168, 4294901760
    %1077 = vmatprep.subr.mxu0 %v1076
    %v1078 = vand.u32 %v167, 4294901760
    %1079 = vmatpush1.msra.mxu0 %v1078
    %v1080 = vand.u32 %v170, 4294901760
    %1081 = vmatprep.subr.mxu0 %v1080
    %v1082 = vand.u32 %v169, 4294901760
    %1083 = vmatpush1.msra.mxu0 %v1082
    %v1084 = vand.u32 %v172, 4294901760
    %1085 = vmatprep.subr.mxu0 %v1084
    %v1086 = vand.u32 %v171, 4294901760
    %1087 = vmatpush1.msra.mxu0 %v1086
    %v1088 = vand.u32 %v174, 4294901760
    %1089 = vmatprep.subr.mxu0 %v1088
    %v1090 = vand.u32 %v173, 4294901760
    %1091 = vmatpush1.msra.mxu0 %v1090
    %v1092 = vand.u32 %v176, 4294901760
    %1093 = vmatprep.subr.mxu0 %v1092
    %v1094 = vand.u32 %v175, 4294901760
    %1095 = vmatpush1.msra.mxu0 %v1094
    %v1096 = vand.u32 %v178, 4294901760
    %1097 = vmatprep.subr.mxu0 %v1096
    %v1098 = vand.u32 %v177, 4294901760
    %1099 = vmatpush1.msra.mxu0 %v1098
    %v1100 = vand.u32 %v180, 4294901760
    %1101 = vmatprep.subr.mxu0 %v1100
    %v1102 = vand.u32 %v179, 4294901760
    %1103 = vmatpush1.msra.mxu0 %v1102
    %v1104 = vand.u32 %v182, 4294901760
    %1105 = vmatprep.subr.mxu0 %v1104
    %v1106 = vand.u32 %v181, 4294901760
    %1107 = vmatpush1.msra.mxu0 %v1106
    %v1108 = vand.u32 %v184, 4294901760
    %1109 = vmatprep.subr.mxu0 %v1108
    %v1110 = vand.u32 %v183, 4294901760
    %1111 = vmatpush1.msra.mxu0 %v1110
    %v1112 = vand.u32 %v186, 4294901760
    %1113 = vmatprep.subr.mxu0 %v1112
    %v1114 = vand.u32 %v185, 4294901760
    %1115 = vmatpush1.msra.mxu0 %v1114
    %v1116 = vand.u32 %v188, 4294901760
    %1117 = vmatprep.subr.mxu0 %v1116
    %v1118 = vand.u32 %v187, 4294901760
    %1119 = vmatpush1.msra.mxu0 %v1118
    %v1120 = vand.u32 %v190, 4294901760
    %1121 = vmatprep.subr.mxu0 %v1120
    %v1122 = vand.u32 %v189, 4294901760
    %1123 = vmatpush1.msra.mxu0 %v1122
    %v1124 = vand.u32 %v192, 4294901760
    %1125 = vmatprep.subr.mxu0 %v1124
    %v1126 = vand.u32 %v191, 4294901760
    %1127 = vmatpush1.msra.mxu0 %v1126
    %v1128 = vand.u32 %v126, 4294901760
    %v1129 = vsub.f32 %v126, %v1128
    %v1130 = vand.u32 %v1129, 4294901760
    %1131 = vmatprep.mubr.f32.mxu0 %v1130
    %v1132 = vand.u32 %v125, 4294901760
    %v1133 = vsub.f32 %v125, %v1132
    %v1134 = vand.u32 %v1133, 4294901760
    %1135 = vmatmul.mubr.f32.gmra.mrb[0].mxu0 %v1134
    %v1136 = vpop.f32.mrb[0].mxu0
    %v1137 = vadd.f32 %v996, %v1136
    %v1138 = vpop.f32.mrb[0].mxu0
    %v1139 = vadd.f32 %v998, %v1138
    %1140 = vdwg.mxu0
    %v1141 = vand.u32 %v130, 4294901760
    %v1142 = vsub.f32 %v130, %v1141
    %v1143 = vand.u32 %v1142, 4294901760
    %1144 = vmatprep.subr.mxu0 %v1143
    %v1145 = vand.u32 %v129, 4294901760
    %v1146 = vsub.f32 %v129, %v1145
    %v1147 = vand.u32 %v1146, 4294901760
    %1148 = vmatpush1.msra.mxu0 %v1147
    %v1149 = vand.u32 %v132, 4294901760
    %v1150 = vsub.f32 %v132, %v1149
    %v1151 = vand.u32 %v1150, 4294901760
    %1152 = vmatprep.subr.mxu0 %v1151
    %v1153 = vand.u32 %v131, 4294901760
    %v1154 = vsub.f32 %v131, %v1153
    %v1155 = vand.u32 %v1154, 4294901760
    %1156 = vmatpush1.msra.mxu0 %v1155
    %v1157 = vand.u32 %v134, 4294901760
    %v1158 = vsub.f32 %v134, %v1157
    %v1159 = vand.u32 %v1158, 4294901760
    %1160 = vmatprep.subr.mxu0 %v1159
    %v1161 = vand.u32 %v133, 4294901760
    %v1162 = vsub.f32 %v133, %v1161
    %v1163 = vand.u32 %v1162, 4294901760
    %1164 = vmatpush1.msra.mxu0 %v1163
    %v1165 = vand.u32 %v136, 4294901760
    %v1166 = vsub.f32 %v136, %v1165
    %v1167 = vand.u32 %v1166, 4294901760
    %1168 = vmatprep.subr.mxu0 %v1167
    %v1169 = vand.u32 %v135, 4294901760
    %v1170 = vsub.f32 %v135, %v1169
    %v1171 = vand.u32 %v1170, 4294901760
    %1172 = vmatpush1.msra.mxu0 %v1171
    %v1173 = vand.u32 %v138, 4294901760
    %v1174 = vsub.f32 %v138, %v1173
    %v1175 = vand.u32 %v1174, 4294901760
    %1176 = vmatprep.subr.mxu0 %v1175
    %v1177 = vand.u32 %v137, 4294901760
    %v1178 = vsub.f32 %v137, %v1177
    %v1179 = vand.u32 %v1178, 4294901760
    %1180 = vmatpush1.msra.mxu0 %v1179
    %v1181 = vand.u32 %v140, 4294901760
    %v1182 = vsub.f32 %v140, %v1181
    %v1183 = vand.u32 %v1182, 4294901760
    %1184 = vmatprep.subr.mxu0 %v1183
    %v1185 = vand.u32 %v139, 4294901760
    %v1186 = vsub.f32 %v139, %v1185
    %v1187 = vand.u32 %v1186, 4294901760
    %1188 = vmatpush1.msra.mxu0 %v1187
    %v1189 = vand.u32 %v142, 4294901760
    %v1190 = vsub.f32 %v142, %v1189
    %v1191 = vand.u32 %v1190, 4294901760
    %1192 = vmatprep.subr.mxu0 %v1191
    %v1193 = vand.u32 %v141, 4294901760
    %v1194 = vsub.f32 %v141, %v1193
    %v1195 = vand.u32 %v1194, 4294901760
    %1196 = vmatpush1.msra.mxu0 %v1195
    %v1197 = vand.u32 %v144, 4294901760
    %v1198 = vsub.f32 %v144, %v1197
    %v1199 = vand.u32 %v1198, 4294901760
    %1200 = vmatprep.subr.mxu0 %v1199
    %v1201 = vand.u32 %v143, 4294901760
    %v1202 = vsub.f32 %v143, %v1201
    %v1203 = vand.u32 %v1202, 4294901760
    %1204 = vmatpush1.msra.mxu0 %v1203
    %v1205 = vand.u32 %v146, 4294901760
    %v1206 = vsub.f32 %v146, %v1205
    %v1207 = vand.u32 %v1206, 4294901760
    %1208 = vmatprep.subr.mxu0 %v1207
    %v1209 = vand.u32 %v145, 4294901760
    %v1210 = vsub.f32 %v145, %v1209
    %v1211 = vand.u32 %v1210, 4294901760
    %1212 = vmatpush1.msra.mxu0 %v1211
    %v1213 = vand.u32 %v148, 4294901760
    %v1214 = vsub.f32 %v148, %v1213
    %v1215 = vand.u32 %v1214, 4294901760
    %1216 = vmatprep.subr.mxu0 %v1215
    %v1217 = vand.u32 %v147, 4294901760
    %v1218 = vsub.f32 %v147, %v1217
    %v1219 = vand.u32 %v1218, 4294901760
    %1220 = vmatpush1.msra.mxu0 %v1219
    %v1221 = vand.u32 %v150, 4294901760
    %v1222 = vsub.f32 %v150, %v1221
    %v1223 = vand.u32 %v1222, 4294901760
    %1224 = vmatprep.subr.mxu0 %v1223
    %v1225 = vand.u32 %v149, 4294901760
    %v1226 = vsub.f32 %v149, %v1225
    %v1227 = vand.u32 %v1226, 4294901760
    %1228 = vmatpush1.msra.mxu0 %v1227
    %v1229 = vand.u32 %v152, 4294901760
    %v1230 = vsub.f32 %v152, %v1229
    %v1231 = vand.u32 %v1230, 4294901760
    %1232 = vmatprep.subr.mxu0 %v1231
    %v1233 = vand.u32 %v151, 4294901760
    %v1234 = vsub.f32 %v151, %v1233
    %v1235 = vand.u32 %v1234, 4294901760
    %1236 = vmatpush1.msra.mxu0 %v1235
    %v1237 = vand.u32 %v154, 4294901760
    %v1238 = vsub.f32 %v154, %v1237
    %v1239 = vand.u32 %v1238, 4294901760
    %1240 = vmatprep.subr.mxu0 %v1239
    %v1241 = vand.u32 %v153, 4294901760
    %v1242 = vsub.f32 %v153, %v1241
    %v1243 = vand.u32 %v1242, 4294901760
    %1244 = vmatpush1.msra.mxu0 %v1243
    %v1245 = vand.u32 %v156, 4294901760
    %v1246 = vsub.f32 %v156, %v1245
    %v1247 = vand.u32 %v1246, 4294901760
    %1248 = vmatprep.subr.mxu0 %v1247
    %v1249 = vand.u32 %v155, 4294901760
    %v1250 = vsub.f32 %v155, %v1249
    %v1251 = vand.u32 %v1250, 4294901760
    %1252 = vmatpush1.msra.mxu0 %v1251
    %v1253 = vand.u32 %v158, 4294901760
    %v1254 = vsub.f32 %v158, %v1253
    %v1255 = vand.u32 %v1254, 4294901760
    %1256 = vmatprep.subr.mxu0 %v1255
    %v1257 = vand.u32 %v157, 4294901760
    %v1258 = vsub.f32 %v157, %v1257
    %v1259 = vand.u32 %v1258, 4294901760
    %1260 = vmatpush1.msra.mxu0 %v1259
    %v1261 = vand.u32 %v160, 4294901760
    %v1262 = vsub.f32 %v160, %v1261
    %v1263 = vand.u32 %v1262, 4294901760
    %1264 = vmatprep.subr.mxu0 %v1263
    %v1265 = vand.u32 %v159, 4294901760
    %v1266 = vsub.f32 %v159, %v1265
    %v1267 = vand.u32 %v1266, 4294901760
    %1268 = vmatpush1.msra.mxu0 %v1267
    %v1269 = vand.u32 %v162, 4294901760
    %v1270 = vsub.f32 %v162, %v1269
    %v1271 = vand.u32 %v1270, 4294901760
    %1272 = vmatprep.subr.mxu0 %v1271
    %v1273 = vand.u32 %v161, 4294901760
    %v1274 = vsub.f32 %v161, %v1273
    %v1275 = vand.u32 %v1274, 4294901760
    %1276 = vmatpush1.msra.mxu0 %v1275
    %v1277 = vand.u32 %v164, 4294901760
    %v1278 = vsub.f32 %v164, %v1277
    %v1279 = vand.u32 %v1278, 4294901760
    %1280 = vmatprep.subr.mxu0 %v1279
    %v1281 = vand.u32 %v163, 4294901760
    %v1282 = vsub.f32 %v163, %v1281
    %v1283 = vand.u32 %v1282, 4294901760
    %1284 = vmatpush1.msra.mxu0 %v1283
    %v1285 = vand.u32 %v166, 4294901760
    %v1286 = vsub.f32 %v166, %v1285
    %v1287 = vand.u32 %v1286, 4294901760
    %1288 = vmatprep.subr.mxu0 %v1287
    %v1289 = vand.u32 %v165, 4294901760
    %v1290 = vsub.f32 %v165, %v1289
    %v1291 = vand.u32 %v1290, 4294901760
    %1292 = vmatpush1.msra.mxu0 %v1291
    %v1293 = vand.u32 %v168, 4294901760
    %v1294 = vsub.f32 %v168, %v1293
    %v1295 = vand.u32 %v1294, 4294901760
    %1296 = vmatprep.subr.mxu0 %v1295
    %v1297 = vand.u32 %v167, 4294901760
    %v1298 = vsub.f32 %v167, %v1297
    %v1299 = vand.u32 %v1298, 4294901760
    %1300 = vmatpush1.msra.mxu0 %v1299
    %v1301 = vand.u32 %v170, 4294901760
    %v1302 = vsub.f32 %v170, %v1301
    %v1303 = vand.u32 %v1302, 4294901760
    %1304 = vmatprep.subr.mxu0 %v1303
    %v1305 = vand.u32 %v169, 4294901760
    %v1306 = vsub.f32 %v169, %v1305
    %v1307 = vand.u32 %v1306, 4294901760
    %1308 = vmatpush1.msra.mxu0 %v1307
    %v1309 = vand.u32 %v172, 4294901760
    %v1310 = vsub.f32 %v172, %v1309
    %v1311 = vand.u32 %v1310, 4294901760
    %1312 = vmatprep.subr.mxu0 %v1311
    %v1313 = vand.u32 %v171, 4294901760
    %v1314 = vsub.f32 %v171, %v1313
    %v1315 = vand.u32 %v1314, 4294901760
    %1316 = vmatpush1.msra.mxu0 %v1315
    %v1317 = vand.u32 %v174, 4294901760
    %v1318 = vsub.f32 %v174, %v1317
    %v1319 = vand.u32 %v1318, 4294901760
    %1320 = vmatprep.subr.mxu0 %v1319
    %v1321 = vand.u32 %v173, 4294901760
    %v1322 = vsub.f32 %v173, %v1321
    %v1323 = vand.u32 %v1322, 4294901760
    %1324 = vmatpush1.msra.mxu0 %v1323
    %v1325 = vand.u32 %v176, 4294901760
    %v1326 = vsub.f32 %v176, %v1325
    %v1327 = vand.u32 %v1326, 4294901760
    %1328 = vmatprep.subr.mxu0 %v1327
    %v1329 = vand.u32 %v175, 4294901760
    %v1330 = vsub.f32 %v175, %v1329
    %v1331 = vand.u32 %v1330, 4294901760
    %1332 = vmatpush1.msra.mxu0 %v1331
    %v1333 = vand.u32 %v178, 4294901760
    %v1334 = vsub.f32 %v178, %v1333
    %v1335 = vand.u32 %v1334, 4294901760
    %1336 = vmatprep.subr.mxu0 %v1335
    %v1337 = vand.u32 %v177, 4294901760
    %v1338 = vsub.f32 %v177, %v1337
    %v1339 = vand.u32 %v1338, 4294901760
    %1340 = vmatpush1.msra.mxu0 %v1339
    %v1341 = vand.u32 %v180, 4294901760
    %v1342 = vsub.f32 %v180, %v1341
    %v1343 = vand.u32 %v1342, 4294901760
    %1344 = vmatprep.subr.mxu0 %v1343
    %v1345 = vand.u32 %v179, 4294901760
    %v1346 = vsub.f32 %v179, %v1345
    %v1347 = vand.u32 %v1346, 4294901760
    %1348 = vmatpush1.msra.mxu0 %v1347
    %v1349 = vand.u32 %v182, 4294901760
    %v1350 = vsub.f32 %v182, %v1349
    %v1351 = vand.u32 %v1350, 4294901760
    %1352 = vmatprep.subr.mxu0 %v1351
    %v1353 = vand.u32 %v181, 4294901760
    %v1354 = vsub.f32 %v181, %v1353
    %v1355 = vand.u32 %v1354, 4294901760
    %1356 = vmatpush1.msra.mxu0 %v1355
    %v1357 = vand.u32 %v184, 4294901760
    %v1358 = vsub.f32 %v184, %v1357
    %v1359 = vand.u32 %v1358, 4294901760
    %1360 = vmatprep.subr.mxu0 %v1359
    %v1361 = vand.u32 %v183, 4294901760
    %v1362 = vsub.f32 %v183, %v1361
    %v1363 = vand.u32 %v1362, 4294901760
    %1364 = vmatpush1.msra.mxu0 %v1363
    %v1365 = vand.u32 %v186, 4294901760
    %v1366 = vsub.f32 %v186, %v1365
    %v1367 = vand.u32 %v1366, 4294901760
    %1368 = vmatprep.subr.mxu0 %v1367
    %v1369 = vand.u32 %v185, 4294901760
    %v1370 = vsub.f32 %v185, %v1369
    %v1371 = vand.u32 %v1370, 4294901760
    %1372 = vmatpush1.msra.mxu0 %v1371
    %v1373 = vand.u32 %v188, 4294901760
    %v1374 = vsub.f32 %v188, %v1373
    %v1375 = vand.u32 %v1374, 4294901760
    %1376 = vmatprep.subr.mxu0 %v1375
    %v1377 = vand.u32 %v187, 4294901760
    %v1378 = vsub.f32 %v187, %v1377
    %v1379 = vand.u32 %v1378, 4294901760
    %1380 = vmatpush1.msra.mxu0 %v1379
    %v1381 = vand.u32 %v190, 4294901760
    %v1382 = vsub.f32 %v190, %v1381
    %v1383 = vand.u32 %v1382, 4294901760
    %1384 = vmatprep.subr.mxu0 %v1383
    %v1385 = vand.u32 %v189, 4294901760
    %v1386 = vsub.f32 %v189, %v1385
    %v1387 = vand.u32 %v1386, 4294901760
    %1388 = vmatpush1.msra.mxu0 %v1387
    %v1389 = vand.u32 %v192, 4294901760
    %v1390 = vsub.f32 %v192, %v1389
    %v1391 = vand.u32 %v1390, 4294901760
    %1392 = vmatprep.subr.mxu0 %v1391
    %v1393 = vand.u32 %v191, 4294901760
    %v1394 = vsub.f32 %v191, %v1393
    %v1395 = vand.u32 %v1394, 4294901760
    %1396 = vmatpush1.msra.mxu0 %v1395
    %v1397 = vand.u32 %v126, 4294901760
    %1398 = vmatprep.mubr.f32.mxu0 %v1397
    %v1399 = vand.u32 %v125, 4294901760
    %1400 = vmatmul.mubr.f32.gmra.mrb[0].mxu0 %v1399
    %v1401 = vpop.f32.mrb[0].mxu0
    %v1402 = vadd.f32 %v1137, %v1401
    %v1403 = vpop.f32.mrb[0].mxu0
    %v1404 = vadd.f32 %v1139, %v1403
    %1405 = vdwg.mxu0
    %v1406 = vand.u32 %v130, 4294901760
    %1407 = vmatprep.subr.mxu0 %v1406
    %v1408 = vand.u32 %v129, 4294901760
    %1409 = vmatpush1.msra.mxu0 %v1408
    %v1410 = vand.u32 %v132, 4294901760
    %1411 = vmatprep.subr.mxu0 %v1410
    %v1412 = vand.u32 %v131, 4294901760
    %1413 = vmatpush1.msra.mxu0 %v1412
    %v1414 = vand.u32 %v134, 4294901760
    %1415 = vmatprep.subr.mxu0 %v1414
    %v1416 = vand.u32 %v133, 4294901760
    %1417 = vmatpush1.msra.mxu0 %v1416
    %v1418 = vand.u32 %v136, 4294901760
    %1419 = vmatprep.subr.mxu0 %v1418
    %v1420 = vand.u32 %v135, 4294901760
    %1421 = vmatpush1.msra.mxu0 %v1420
    %v1422 = vand.u32 %v138, 4294901760
    %1423 = vmatprep.subr.mxu0 %v1422
    %v1424 = vand.u32 %v137, 4294901760
    %1425 = vmatpush1.msra.mxu0 %v1424
    %v1426 = vand.u32 %v140, 4294901760
    %1427 = vmatprep.subr.mxu0 %v1426
    %v1428 = vand.u32 %v139, 4294901760
    %1429 = vmatpush1.msra.mxu0 %v1428
    %v1430 = vand.u32 %v142, 4294901760
    %1431 = vmatprep.subr.mxu0 %v1430
    %v1432 = vand.u32 %v141, 4294901760
    %1433 = vmatpush1.msra.mxu0 %v1432
    %v1434 = vand.u32 %v144, 4294901760
    %1435 = vmatprep.subr.mxu0 %v1434
    %v1436 = vand.u32 %v143, 4294901760
    %1437 = vmatpush1.msra.mxu0 %v1436
    %v1438 = vand.u32 %v146, 4294901760
    %1439 = vmatprep.subr.mxu0 %v1438
    %v1440 = vand.u32 %v145, 4294901760
    %1441 = vmatpush1.msra.mxu0 %v1440
    %v1442 = vand.u32 %v148, 4294901760
    %1443 = vmatprep.subr.mxu0 %v1442
    %v1444 = vand.u32 %v147, 4294901760
    %1445 = vmatpush1.msra.mxu0 %v1444
    %v1446 = vand.u32 %v150, 4294901760
    %1447 = vmatprep.subr.mxu0 %v1446
    %v1448 = vand.u32 %v149, 4294901760
    %1449 = vmatpush1.msra.mxu0 %v1448
    %v1450 = vand.u32 %v152, 4294901760
    %1451 = vmatprep.subr.mxu0 %v1450
    %v1452 = vand.u32 %v151, 4294901760
    %1453 = vmatpush1.msra.mxu0 %v1452
    %v1454 = vand.u32 %v154, 4294901760
    %1455 = vmatprep.subr.mxu0 %v1454
    %v1456 = vand.u32 %v153, 4294901760
    %1457 = vmatpush1.msra.mxu0 %v1456
    %v1458 = vand.u32 %v156, 4294901760
    %1459 = vmatprep.subr.mxu0 %v1458
    %v1460 = vand.u32 %v155, 4294901760
    %1461 = vmatpush1.msra.mxu0 %v1460
    %v1462 = vand.u32 %v158, 4294901760
    %1463 = vmatprep.subr.mxu0 %v1462
    %v1464 = vand.u32 %v157, 4294901760
    %1465 = vmatpush1.msra.mxu0 %v1464
    %v1466 = vand.u32 %v160, 4294901760
    %1467 = vmatprep.subr.mxu0 %v1466
    %v1468 = vand.u32 %v159, 4294901760
    %1469 = vmatpush1.msra.mxu0 %v1468
    %v1470 = vand.u32 %v162, 4294901760
    %1471 = vmatprep.subr.mxu0 %v1470
    %v1472 = vand.u32 %v161, 4294901760
    %1473 = vmatpush1.msra.mxu0 %v1472
    %v1474 = vand.u32 %v164, 4294901760
    %1475 = vmatprep.subr.mxu0 %v1474
    %v1476 = vand.u32 %v163, 4294901760
    %1477 = vmatpush1.msra.mxu0 %v1476
    %v1478 = vand.u32 %v166, 4294901760
    %1479 = vmatprep.subr.mxu0 %v1478
    %v1480 = vand.u32 %v165, 4294901760
    %1481 = vmatpush1.msra.mxu0 %v1480
    %v1482 = vand.u32 %v168, 4294901760
    %1483 = vmatprep.subr.mxu0 %v1482
    %v1484 = vand.u32 %v167, 4294901760
    %1485 = vmatpush1.msra.mxu0 %v1484
    %v1486 = vand.u32 %v170, 4294901760
    %1487 = vmatprep.subr.mxu0 %v1486
    %v1488 = vand.u32 %v169, 4294901760
    %1489 = vmatpush1.msra.mxu0 %v1488
    %v1490 = vand.u32 %v172, 4294901760
    %1491 = vmatprep.subr.mxu0 %v1490
    %v1492 = vand.u32 %v171, 4294901760
    %1493 = vmatpush1.msra.mxu0 %v1492
    %v1494 = vand.u32 %v174, 4294901760
    %1495 = vmatprep.subr.mxu0 %v1494
    %v1496 = vand.u32 %v173, 4294901760
    %1497 = vmatpush1.msra.mxu0 %v1496
    %v1498 = vand.u32 %v176, 4294901760
    %1499 = vmatprep.subr.mxu0 %v1498
    %v1500 = vand.u32 %v175, 4294901760
    %1501 = vmatpush1.msra.mxu0 %v1500
    %v1502 = vand.u32 %v178, 4294901760
    %1503 = vmatprep.subr.mxu0 %v1502
    %v1504 = vand.u32 %v177, 4294901760
    %1505 = vmatpush1.msra.mxu0 %v1504
    %v1506 = vand.u32 %v180, 4294901760
    %1507 = vmatprep.subr.mxu0 %v1506
    %v1508 = vand.u32 %v179, 4294901760
    %1509 = vmatpush1.msra.mxu0 %v1508
    %v1510 = vand.u32 %v182, 4294901760
    %1511 = vmatprep.subr.mxu0 %v1510
    %v1512 = vand.u32 %v181, 4294901760
    %1513 = vmatpush1.msra.mxu0 %v1512
    %v1514 = vand.u32 %v184, 4294901760
    %1515 = vmatprep.subr.mxu0 %v1514
    %v1516 = vand.u32 %v183, 4294901760
    %1517 = vmatpush1.msra.mxu0 %v1516
    %v1518 = vand.u32 %v186, 4294901760
    %1519 = vmatprep.subr.mxu0 %v1518
    %v1520 = vand.u32 %v185, 4294901760
    %1521 = vmatpush1.msra.mxu0 %v1520
    %v1522 = vand.u32 %v188, 4294901760
    %1523 = vmatprep.subr.mxu0 %v1522
    %v1524 = vand.u32 %v187, 4294901760
    %1525 = vmatpush1.msra.mxu0 %v1524
    %v1526 = vand.u32 %v190, 4294901760
    %1527 = vmatprep.subr.mxu0 %v1526
    %v1528 = vand.u32 %v189, 4294901760
    %1529 = vmatpush1.msra.mxu0 %v1528
    %v1530 = vand.u32 %v192, 4294901760
    %1531 = vmatprep.subr.mxu0 %v1530
    %v1532 = vand.u32 %v191, 4294901760
    %1533 = vmatpush1.msra.mxu0 %v1532
    %v1534 = vand.u32 %v126, 4294901760
    %1535 = vmatprep.mubr.f32.mxu0 %v1534
    %v1536 = vand.u32 %v125, 4294901760
    %1537 = vmatmul.mubr.f32.gmra.mrb[0].mxu0 %v1536
    %v1538 = vpop.f32.mrb[0].mxu0
    %v1539 = vadd.f32 %v1402, %v1538
    %v1540 = vpop.f32.mrb[0].mxu0
    %v1541 = vadd.f32 %v1404, %v1540
    %1542 = vdwg.mxu0
    %v1543 = vand.u32 %v194, 4294901760
    %1544 = vmatprep.subr.mxu0 %v1543
    %v1545 = vand.u32 %v193, 4294901760
    %1546 = vmatpush1.msra.mxu0 %v1545
    %v1547 = vand.u32 %v196, 4294901760
    %1548 = vmatprep.subr.mxu0 %v1547
    %v1549 = vand.u32 %v195, 4294901760
    %1550 = vmatpush1.msra.mxu0 %v1549
    %v1551 = vand.u32 %v198, 4294901760
    %1552 = vmatprep.subr.mxu0 %v1551
    %v1553 = vand.u32 %v197, 4294901760
    %1554 = vmatpush1.msra.mxu0 %v1553
    %v1555 = vand.u32 %v200, 4294901760
    %1556 = vmatprep.subr.mxu0 %v1555
    %v1557 = vand.u32 %v199, 4294901760
    %1558 = vmatpush1.msra.mxu0 %v1557
    %v1559 = vand.u32 %v202, 4294901760
    %1560 = vmatprep.subr.mxu0 %v1559
    %v1561 = vand.u32 %v201, 4294901760
    %1562 = vmatpush1.msra.mxu0 %v1561
    %v1563 = vand.u32 %v204, 4294901760
    %1564 = vmatprep.subr.mxu0 %v1563
    %v1565 = vand.u32 %v203, 4294901760
    %1566 = vmatpush1.msra.mxu0 %v1565
    %v1567 = vand.u32 %v206, 4294901760
    %1568 = vmatprep.subr.mxu0 %v1567
    %v1569 = vand.u32 %v205, 4294901760
    %1570 = vmatpush1.msra.mxu0 %v1569
    %v1571 = vand.u32 %v208, 4294901760
    %1572 = vmatprep.subr.mxu0 %v1571
    %v1573 = vand.u32 %v207, 4294901760
    %1574 = vmatpush1.msra.mxu0 %v1573
    %v1575 = vand.u32 %v210, 4294901760
    %1576 = vmatprep.subr.mxu0 %v1575
    %v1577 = vand.u32 %v209, 4294901760
    %1578 = vmatpush1.msra.mxu0 %v1577
    %v1579 = vand.u32 %v212, 4294901760
    %1580 = vmatprep.subr.mxu0 %v1579
    %v1581 = vand.u32 %v211, 4294901760
    %1582 = vmatpush1.msra.mxu0 %v1581
    %v1583 = vand.u32 %v214, 4294901760
    %1584 = vmatprep.subr.mxu0 %v1583
    %v1585 = vand.u32 %v213, 4294901760
    %1586 = vmatpush1.msra.mxu0 %v1585
    %v1587 = vand.u32 %v216, 4294901760
    %1588 = vmatprep.subr.mxu0 %v1587
    %v1589 = vand.u32 %v215, 4294901760
    %1590 = vmatpush1.msra.mxu0 %v1589
    %v1591 = vand.u32 %v218, 4294901760
    %1592 = vmatprep.subr.mxu0 %v1591
    %v1593 = vand.u32 %v217, 4294901760
    %1594 = vmatpush1.msra.mxu0 %v1593
    %v1595 = vand.u32 %v220, 4294901760
    %1596 = vmatprep.subr.mxu0 %v1595
    %v1597 = vand.u32 %v219, 4294901760
    %1598 = vmatpush1.msra.mxu0 %v1597
    %v1599 = vand.u32 %v222, 4294901760
    %1600 = vmatprep.subr.mxu0 %v1599
    %v1601 = vand.u32 %v221, 4294901760
    %1602 = vmatpush1.msra.mxu0 %v1601
    %v1603 = vand.u32 %v224, 4294901760
    %1604 = vmatprep.subr.mxu0 %v1603
    %v1605 = vand.u32 %v223, 4294901760
    %1606 = vmatpush1.msra.mxu0 %v1605
    %v1607 = vand.u32 %v226, 4294901760
    %1608 = vmatprep.subr.mxu0 %v1607
    %v1609 = vand.u32 %v225, 4294901760
    %1610 = vmatpush1.msra.mxu0 %v1609
    %v1611 = vand.u32 %v228, 4294901760
    %1612 = vmatprep.subr.mxu0 %v1611
    %v1613 = vand.u32 %v227, 4294901760
    %1614 = vmatpush1.msra.mxu0 %v1613
    %v1615 = vand.u32 %v230, 4294901760
    %1616 = vmatprep.subr.mxu0 %v1615
    %v1617 = vand.u32 %v229, 4294901760
    %1618 = vmatpush1.msra.mxu0 %v1617
    %v1619 = vand.u32 %v232, 4294901760
    %1620 = vmatprep.subr.mxu0 %v1619
    %v1621 = vand.u32 %v231, 4294901760
    %1622 = vmatpush1.msra.mxu0 %v1621
    %v1623 = vand.u32 %v234, 4294901760
    %1624 = vmatprep.subr.mxu0 %v1623
    %v1625 = vand.u32 %v233, 4294901760
    %1626 = vmatpush1.msra.mxu0 %v1625
    %v1627 = vand.u32 %v236, 4294901760
    %1628 = vmatprep.subr.mxu0 %v1627
    %v1629 = vand.u32 %v235, 4294901760
    %1630 = vmatpush1.msra.mxu0 %v1629
    %v1631 = vand.u32 %v238, 4294901760
    %1632 = vmatprep.subr.mxu0 %v1631
    %v1633 = vand.u32 %v237, 4294901760
    %1634 = vmatpush1.msra.mxu0 %v1633
    %v1635 = vand.u32 %v240, 4294901760
    %1636 = vmatprep.subr.mxu0 %v1635
    %v1637 = vand.u32 %v239, 4294901760
    %1638 = vmatpush1.msra.mxu0 %v1637
    %v1639 = vand.u32 %v242, 4294901760
    %1640 = vmatprep.subr.mxu0 %v1639
    %v1641 = vand.u32 %v241, 4294901760
    %1642 = vmatpush1.msra.mxu0 %v1641
    %v1643 = vand.u32 %v244, 4294901760
    %1644 = vmatprep.subr.mxu0 %v1643
    %v1645 = vand.u32 %v243, 4294901760
    %1646 = vmatpush1.msra.mxu0 %v1645
    %v1647 = vand.u32 %v246, 4294901760
    %1648 = vmatprep.subr.mxu0 %v1647
    %v1649 = vand.u32 %v245, 4294901760
    %1650 = vmatpush1.msra.mxu0 %v1649
    %v1651 = vand.u32 %v248, 4294901760
    %1652 = vmatprep.subr.mxu0 %v1651
    %v1653 = vand.u32 %v247, 4294901760
    %1654 = vmatpush1.msra.mxu0 %v1653
    %v1655 = vand.u32 %v250, 4294901760
    %1656 = vmatprep.subr.mxu0 %v1655
    %v1657 = vand.u32 %v249, 4294901760
    %1658 = vmatpush1.msra.mxu0 %v1657
    %v1659 = vand.u32 %v252, 4294901760
    %1660 = vmatprep.subr.mxu0 %v1659
    %v1661 = vand.u32 %v251, 4294901760
    %1662 = vmatpush1.msra.mxu0 %v1661
    %v1663 = vand.u32 %v254, 4294901760
    %1664 = vmatprep.subr.mxu0 %v1663
    %v1665 = vand.u32 %v253, 4294901760
    %1666 = vmatpush1.msra.mxu0 %v1665
    %v1667 = vand.u32 %v256, 4294901760
    %1668 = vmatprep.subr.mxu0 %v1667
    %v1669 = vand.u32 %v255, 4294901760
    %1670 = vmatpush1.msra.mxu0 %v1669
    %v1671 = vand.u32 %v128, 4294901760
    %v1672 = vsub.f32 %v128, %v1671
    %v1673 = vand.u32 %v1672, 4294901760
    %v1674 = vsub.f32 %v1672, %v1673
    %v1675 = vand.u32 %v1674, 4294901760
    %1676 = vmatprep.mubr.f32.mxu0 %v1675
    %v1677 = vand.u32 %v127, 4294901760
    %v1678 = vsub.f32 %v127, %v1677
    %v1679 = vand.u32 %v1678, 4294901760
    %v1680 = vsub.f32 %v1678, %v1679
    %v1681 = vand.u32 %v1680, 4294901760
    %1682 = vmatmul.mubr.f32.gmra.mrb[0].mxu0 %v1681
    %v1683 = vpop.f32.mrb[0].mxu0
    %v1684 = vadd.f32 %v1539, %v1683
    %v1685 = vpop.f32.mrb[0].mxu0
    %v1686 = vadd.f32 %v1541, %v1685
    %1687 = vdwg.mxu0
    %v1688 = vand.u32 %v194, 4294901760
    %v1689 = vsub.f32 %v194, %v1688
    %v1690 = vand.u32 %v1689, 4294901760
    %v1691 = vsub.f32 %v1689, %v1690
    %v1692 = vand.u32 %v1691, 4294901760
    %1693 = vmatprep.subr.mxu0 %v1692
    %v1694 = vand.u32 %v193, 4294901760
    %v1695 = vsub.f32 %v193, %v1694
    %v1696 = vand.u32 %v1695, 4294901760
    %v1697 = vsub.f32 %v1695, %v1696
    %v1698 = vand.u32 %v1697, 4294901760
    %1699 = vmatpush1.msra.mxu0 %v1698
    %v1700 = vand.u32 %v196, 4294901760
    %v1701 = vsub.f32 %v196, %v1700
    %v1702 = vand.u32 %v1701, 4294901760
    %v1703 = vsub.f32 %v1701, %v1702
    %v1704 = vand.u32 %v1703, 4294901760
    %1705 = vmatprep.subr.mxu0 %v1704
    %v1706 = vand.u32 %v195, 4294901760
    %v1707 = vsub.f32 %v195, %v1706
    %v1708 = vand.u32 %v1707, 4294901760
    %v1709 = vsub.f32 %v1707, %v1708
    %v1710 = vand.u32 %v1709, 4294901760
    %1711 = vmatpush1.msra.mxu0 %v1710
    %v1712 = vand.u32 %v198, 4294901760
    %v1713 = vsub.f32 %v198, %v1712
    %v1714 = vand.u32 %v1713, 4294901760
    %v1715 = vsub.f32 %v1713, %v1714
    %v1716 = vand.u32 %v1715, 4294901760
    %1717 = vmatprep.subr.mxu0 %v1716
    %v1718 = vand.u32 %v197, 4294901760
    %v1719 = vsub.f32 %v197, %v1718
    %v1720 = vand.u32 %v1719, 4294901760
    %v1721 = vsub.f32 %v1719, %v1720
    %v1722 = vand.u32 %v1721, 4294901760
    %1723 = vmatpush1.msra.mxu0 %v1722
    %v1724 = vand.u32 %v200, 4294901760
    %v1725 = vsub.f32 %v200, %v1724
    %v1726 = vand.u32 %v1725, 4294901760
    %v1727 = vsub.f32 %v1725, %v1726
    %v1728 = vand.u32 %v1727, 4294901760
    %1729 = vmatprep.subr.mxu0 %v1728
    %v1730 = vand.u32 %v199, 4294901760
    %v1731 = vsub.f32 %v199, %v1730
    %v1732 = vand.u32 %v1731, 4294901760
    %v1733 = vsub.f32 %v1731, %v1732
    %v1734 = vand.u32 %v1733, 4294901760
    %1735 = vmatpush1.msra.mxu0 %v1734
    %v1736 = vand.u32 %v202, 4294901760
    %v1737 = vsub.f32 %v202, %v1736
    %v1738 = vand.u32 %v1737, 4294901760
    %v1739 = vsub.f32 %v1737, %v1738
    %v1740 = vand.u32 %v1739, 4294901760
    %1741 = vmatprep.subr.mxu0 %v1740
    %v1742 = vand.u32 %v201, 4294901760
    %v1743 = vsub.f32 %v201, %v1742
    %v1744 = vand.u32 %v1743, 4294901760
    %v1745 = vsub.f32 %v1743, %v1744
    %v1746 = vand.u32 %v1745, 4294901760
    %1747 = vmatpush1.msra.mxu0 %v1746
    %v1748 = vand.u32 %v204, 4294901760
    %v1749 = vsub.f32 %v204, %v1748
    %v1750 = vand.u32 %v1749, 4294901760
    %v1751 = vsub.f32 %v1749, %v1750
    %v1752 = vand.u32 %v1751, 4294901760
    %1753 = vmatprep.subr.mxu0 %v1752
    %v1754 = vand.u32 %v203, 4294901760
    %v1755 = vsub.f32 %v203, %v1754
    %v1756 = vand.u32 %v1755, 4294901760
    %v1757 = vsub.f32 %v1755, %v1756
    %v1758 = vand.u32 %v1757, 4294901760
    %1759 = vmatpush1.msra.mxu0 %v1758
    %v1760 = vand.u32 %v206, 4294901760
    %v1761 = vsub.f32 %v206, %v1760
    %v1762 = vand.u32 %v1761, 4294901760
    %v1763 = vsub.f32 %v1761, %v1762
    %v1764 = vand.u32 %v1763, 4294901760
    %1765 = vmatprep.subr.mxu0 %v1764
    %v1766 = vand.u32 %v205, 4294901760
    %v1767 = vsub.f32 %v205, %v1766
    %v1768 = vand.u32 %v1767, 4294901760
    %v1769 = vsub.f32 %v1767, %v1768
    %v1770 = vand.u32 %v1769, 4294901760
    %1771 = vmatpush1.msra.mxu0 %v1770
    %v1772 = vand.u32 %v208, 4294901760
    %v1773 = vsub.f32 %v208, %v1772
    %v1774 = vand.u32 %v1773, 4294901760
    %v1775 = vsub.f32 %v1773, %v1774
    %v1776 = vand.u32 %v1775, 4294901760
    %1777 = vmatprep.subr.mxu0 %v1776
    %v1778 = vand.u32 %v207, 4294901760
    %v1779 = vsub.f32 %v207, %v1778
    %v1780 = vand.u32 %v1779, 4294901760
    %v1781 = vsub.f32 %v1779, %v1780
    %v1782 = vand.u32 %v1781, 4294901760
    %1783 = vmatpush1.msra.mxu0 %v1782
    %v1784 = vand.u32 %v210, 4294901760
    %v1785 = vsub.f32 %v210, %v1784
    %v1786 = vand.u32 %v1785, 4294901760
    %v1787 = vsub.f32 %v1785, %v1786
    %v1788 = vand.u32 %v1787, 4294901760
    %1789 = vmatprep.subr.mxu0 %v1788
    %v1790 = vand.u32 %v209, 4294901760
    %v1791 = vsub.f32 %v209, %v1790
    %v1792 = vand.u32 %v1791, 4294901760
    %v1793 = vsub.f32 %v1791, %v1792
    %v1794 = vand.u32 %v1793, 4294901760
    %1795 = vmatpush1.msra.mxu0 %v1794
    %v1796 = vand.u32 %v212, 4294901760
    %v1797 = vsub.f32 %v212, %v1796
    %v1798 = vand.u32 %v1797, 4294901760
    %v1799 = vsub.f32 %v1797, %v1798
    %v1800 = vand.u32 %v1799, 4294901760
    %1801 = vmatprep.subr.mxu0 %v1800
    %v1802 = vand.u32 %v211, 4294901760
    %v1803 = vsub.f32 %v211, %v1802
    %v1804 = vand.u32 %v1803, 4294901760
    %v1805 = vsub.f32 %v1803, %v1804
    %v1806 = vand.u32 %v1805, 4294901760
    %1807 = vmatpush1.msra.mxu0 %v1806
    %v1808 = vand.u32 %v214, 4294901760
    %v1809 = vsub.f32 %v214, %v1808
    %v1810 = vand.u32 %v1809, 4294901760
    %v1811 = vsub.f32 %v1809, %v1810
    %v1812 = vand.u32 %v1811, 4294901760
    %1813 = vmatprep.subr.mxu0 %v1812
    %v1814 = vand.u32 %v213, 4294901760
    %v1815 = vsub.f32 %v213, %v1814
    %v1816 = vand.u32 %v1815, 4294901760
    %v1817 = vsub.f32 %v1815, %v1816
    %v1818 = vand.u32 %v1817, 4294901760
    %1819 = vmatpush1.msra.mxu0 %v1818
    %v1820 = vand.u32 %v216, 4294901760
    %v1821 = vsub.f32 %v216, %v1820
    %v1822 = vand.u32 %v1821, 4294901760
    %v1823 = vsub.f32 %v1821, %v1822
    %v1824 = vand.u32 %v1823, 4294901760
    %1825 = vmatprep.subr.mxu0 %v1824
    %v1826 = vand.u32 %v215, 4294901760
    %v1827 = vsub.f32 %v215, %v1826
    %v1828 = vand.u32 %v1827, 4294901760
    %v1829 = vsub.f32 %v1827, %v1828
    %v1830 = vand.u32 %v1829, 4294901760
    %1831 = vmatpush1.msra.mxu0 %v1830
    %v1832 = vand.u32 %v218, 4294901760
    %v1833 = vsub.f32 %v218, %v1832
    %v1834 = vand.u32 %v1833, 4294901760
    %v1835 = vsub.f32 %v1833, %v1834
    %v1836 = vand.u32 %v1835, 4294901760
    %1837 = vmatprep.subr.mxu0 %v1836
    %v1838 = vand.u32 %v217, 4294901760
    %v1839 = vsub.f32 %v217, %v1838
    %v1840 = vand.u32 %v1839, 4294901760
    %v1841 = vsub.f32 %v1839, %v1840
    %v1842 = vand.u32 %v1841, 4294901760
    %1843 = vmatpush1.msra.mxu0 %v1842
    %v1844 = vand.u32 %v220, 4294901760
    %v1845 = vsub.f32 %v220, %v1844
    %v1846 = vand.u32 %v1845, 4294901760
    %v1847 = vsub.f32 %v1845, %v1846
    %v1848 = vand.u32 %v1847, 4294901760
    %1849 = vmatprep.subr.mxu0 %v1848
    %v1850 = vand.u32 %v219, 4294901760
    %v1851 = vsub.f32 %v219, %v1850
    %v1852 = vand.u32 %v1851, 4294901760
    %v1853 = vsub.f32 %v1851, %v1852
    %v1854 = vand.u32 %v1853, 4294901760
    %1855 = vmatpush1.msra.mxu0 %v1854
    %v1856 = vand.u32 %v222, 4294901760
    %v1857 = vsub.f32 %v222, %v1856
    %v1858 = vand.u32 %v1857, 4294901760
    %v1859 = vsub.f32 %v1857, %v1858
    %v1860 = vand.u32 %v1859, 4294901760
    %1861 = vmatprep.subr.mxu0 %v1860
    %v1862 = vand.u32 %v221, 4294901760
    %v1863 = vsub.f32 %v221, %v1862
    %v1864 = vand.u32 %v1863, 4294901760
    %v1865 = vsub.f32 %v1863, %v1864
    %v1866 = vand.u32 %v1865, 4294901760
    %1867 = vmatpush1.msra.mxu0 %v1866
    %v1868 = vand.u32 %v224, 4294901760
    %v1869 = vsub.f32 %v224, %v1868
    %v1870 = vand.u32 %v1869, 4294901760
    %v1871 = vsub.f32 %v1869, %v1870
    %v1872 = vand.u32 %v1871, 4294901760
    %1873 = vmatprep.subr.mxu0 %v1872
    %v1874 = vand.u32 %v223, 4294901760
    %v1875 = vsub.f32 %v223, %v1874
    %v1876 = vand.u32 %v1875, 4294901760
    %v1877 = vsub.f32 %v1875, %v1876
    %v1878 = vand.u32 %v1877, 4294901760
    %1879 = vmatpush1.msra.mxu0 %v1878
    %v1880 = vand.u32 %v226, 4294901760
    %v1881 = vsub.f32 %v226, %v1880
    %v1882 = vand.u32 %v1881, 4294901760
    %v1883 = vsub.f32 %v1881, %v1882
    %v1884 = vand.u32 %v1883, 4294901760
    %1885 = vmatprep.subr.mxu0 %v1884
    %v1886 = vand.u32 %v225, 4294901760
    %v1887 = vsub.f32 %v225, %v1886
    %v1888 = vand.u32 %v1887, 4294901760
    %v1889 = vsub.f32 %v1887, %v1888
    %v1890 = vand.u32 %v1889, 4294901760
    %1891 = vmatpush1.msra.mxu0 %v1890
    %v1892 = vand.u32 %v228, 4294901760
    %v1893 = vsub.f32 %v228, %v1892
    %v1894 = vand.u32 %v1893, 4294901760
    %v1895 = vsub.f32 %v1893, %v1894
    %v1896 = vand.u32 %v1895, 4294901760
    %1897 = vmatprep.subr.mxu0 %v1896
    %v1898 = vand.u32 %v227, 4294901760
    %v1899 = vsub.f32 %v227, %v1898
    %v1900 = vand.u32 %v1899, 4294901760
    %v1901 = vsub.f32 %v1899, %v1900
    %v1902 = vand.u32 %v1901, 4294901760
    %1903 = vmatpush1.msra.mxu0 %v1902
    %v1904 = vand.u32 %v230, 4294901760
    %v1905 = vsub.f32 %v230, %v1904
    %v1906 = vand.u32 %v1905, 4294901760
    %v1907 = vsub.f32 %v1905, %v1906
    %v1908 = vand.u32 %v1907, 4294901760
    %1909 = vmatprep.subr.mxu0 %v1908
    %v1910 = vand.u32 %v229, 4294901760
    %v1911 = vsub.f32 %v229, %v1910
    %v1912 = vand.u32 %v1911, 4294901760
    %v1913 = vsub.f32 %v1911, %v1912
    %v1914 = vand.u32 %v1913, 4294901760
    %1915 = vmatpush1.msra.mxu0 %v1914
    %v1916 = vand.u32 %v232, 4294901760
    %v1917 = vsub.f32 %v232, %v1916
    %v1918 = vand.u32 %v1917, 4294901760
    %v1919 = vsub.f32 %v1917, %v1918
    %v1920 = vand.u32 %v1919, 4294901760
    %1921 = vmatprep.subr.mxu0 %v1920
    %v1922 = vand.u32 %v231, 4294901760
    %v1923 = vsub.f32 %v231, %v1922
    %v1924 = vand.u32 %v1923, 4294901760
    %v1925 = vsub.f32 %v1923, %v1924
    %v1926 = vand.u32 %v1925, 4294901760
    %1927 = vmatpush1.msra.mxu0 %v1926
    %v1928 = vand.u32 %v234, 4294901760
    %v1929 = vsub.f32 %v234, %v1928
    %v1930 = vand.u32 %v1929, 4294901760
    %v1931 = vsub.f32 %v1929, %v1930
    %v1932 = vand.u32 %v1931, 4294901760
    %1933 = vmatprep.subr.mxu0 %v1932
    %v1934 = vand.u32 %v233, 4294901760
    %v1935 = vsub.f32 %v233, %v1934
    %v1936 = vand.u32 %v1935, 4294901760
    %v1937 = vsub.f32 %v1935, %v1936
    %v1938 = vand.u32 %v1937, 4294901760
    %1939 = vmatpush1.msra.mxu0 %v1938
    %v1940 = vand.u32 %v236, 4294901760
    %v1941 = vsub.f32 %v236, %v1940
    %v1942 = vand.u32 %v1941, 4294901760
    %v1943 = vsub.f32 %v1941, %v1942
    %v1944 = vand.u32 %v1943, 4294901760
    %1945 = vmatprep.subr.mxu0 %v1944
    %v1946 = vand.u32 %v235, 4294901760
    %v1947 = vsub.f32 %v235, %v1946
    %v1948 = vand.u32 %v1947, 4294901760
    %v1949 = vsub.f32 %v1947, %v1948
    %v1950 = vand.u32 %v1949, 4294901760
    %1951 = vmatpush1.msra.mxu0 %v1950
    %v1952 = vand.u32 %v238, 4294901760
    %v1953 = vsub.f32 %v238, %v1952
    %v1954 = vand.u32 %v1953, 4294901760
    %v1955 = vsub.f32 %v1953, %v1954
    %v1956 = vand.u32 %v1955, 4294901760
    %1957 = vmatprep.subr.mxu0 %v1956
    %v1958 = vand.u32 %v237, 4294901760
    %v1959 = vsub.f32 %v237, %v1958
    %v1960 = vand.u32 %v1959, 4294901760
    %v1961 = vsub.f32 %v1959, %v1960
    %v1962 = vand.u32 %v1961, 4294901760
    %1963 = vmatpush1.msra.mxu0 %v1962
    %v1964 = vand.u32 %v240, 4294901760
    %v1965 = vsub.f32 %v240, %v1964
    %v1966 = vand.u32 %v1965, 4294901760
    %v1967 = vsub.f32 %v1965, %v1966
    %v1968 = vand.u32 %v1967, 4294901760
    %1969 = vmatprep.subr.mxu0 %v1968
    %v1970 = vand.u32 %v239, 4294901760
    %v1971 = vsub.f32 %v239, %v1970
    %v1972 = vand.u32 %v1971, 4294901760
    %v1973 = vsub.f32 %v1971, %v1972
    %v1974 = vand.u32 %v1973, 4294901760
    %1975 = vmatpush1.msra.mxu0 %v1974
    %v1976 = vand.u32 %v242, 4294901760
    %v1977 = vsub.f32 %v242, %v1976
    %v1978 = vand.u32 %v1977, 4294901760
    %v1979 = vsub.f32 %v1977, %v1978
    %v1980 = vand.u32 %v1979, 4294901760
    %1981 = vmatprep.subr.mxu0 %v1980
    %v1982 = vand.u32 %v241, 4294901760
    %v1983 = vsub.f32 %v241, %v1982
    %v1984 = vand.u32 %v1983, 4294901760
    %v1985 = vsub.f32 %v1983, %v1984
    %v1986 = vand.u32 %v1985, 4294901760
    %1987 = vmatpush1.msra.mxu0 %v1986
    %v1988 = vand.u32 %v244, 4294901760
    %v1989 = vsub.f32 %v244, %v1988
    %v1990 = vand.u32 %v1989, 4294901760
    %v1991 = vsub.f32 %v1989, %v1990
    %v1992 = vand.u32 %v1991, 4294901760
    %1993 = vmatprep.subr.mxu0 %v1992
    %v1994 = vand.u32 %v243, 4294901760
    %v1995 = vsub.f32 %v243, %v1994
    %v1996 = vand.u32 %v1995, 4294901760
    %v1997 = vsub.f32 %v1995, %v1996
    %v1998 = vand.u32 %v1997, 4294901760
    %1999 = vmatpush1.msra.mxu0 %v1998
    %v2000 = vand.u32 %v246, 4294901760
    %v2001 = vsub.f32 %v246, %v2000
    %v2002 = vand.u32 %v2001, 4294901760
    %v2003 = vsub.f32 %v2001, %v2002
    %v2004 = vand.u32 %v2003, 4294901760
    %2005 = vmatprep.subr.mxu0 %v2004
    %v2006 = vand.u32 %v245, 4294901760
    %v2007 = vsub.f32 %v245, %v2006
    %v2008 = vand.u32 %v2007, 4294901760
    %v2009 = vsub.f32 %v2007, %v2008
    %v2010 = vand.u32 %v2009, 4294901760
    %2011 = vmatpush1.msra.mxu0 %v2010
    %v2012 = vand.u32 %v248, 4294901760
    %v2013 = vsub.f32 %v248, %v2012
    %v2014 = vand.u32 %v2013, 4294901760
    %v2015 = vsub.f32 %v2013, %v2014
    %v2016 = vand.u32 %v2015, 4294901760
    %2017 = vmatprep.subr.mxu0 %v2016
    %v2018 = vand.u32 %v247, 4294901760
    %v2019 = vsub.f32 %v247, %v2018
    %v2020 = vand.u32 %v2019, 4294901760
    %v2021 = vsub.f32 %v2019, %v2020
    %v2022 = vand.u32 %v2021, 4294901760
    %2023 = vmatpush1.msra.mxu0 %v2022
    %v2024 = vand.u32 %v250, 4294901760
    %v2025 = vsub.f32 %v250, %v2024
    %v2026 = vand.u32 %v2025, 4294901760
    %v2027 = vsub.f32 %v2025, %v2026
    %v2028 = vand.u32 %v2027, 4294901760
    %2029 = vmatprep.subr.mxu0 %v2028
    %v2030 = vand.u32 %v249, 4294901760
    %v2031 = vsub.f32 %v249, %v2030
    %v2032 = vand.u32 %v2031, 4294901760
    %v2033 = vsub.f32 %v2031, %v2032
    %v2034 = vand.u32 %v2033, 4294901760
    %2035 = vmatpush1.msra.mxu0 %v2034
    %v2036 = vand.u32 %v252, 4294901760
    %v2037 = vsub.f32 %v252, %v2036
    %v2038 = vand.u32 %v2037, 4294901760
    %v2039 = vsub.f32 %v2037, %v2038
    %v2040 = vand.u32 %v2039, 4294901760
    %2041 = vmatprep.subr.mxu0 %v2040
    %v2042 = vand.u32 %v251, 4294901760
    %v2043 = vsub.f32 %v251, %v2042
    %v2044 = vand.u32 %v2043, 4294901760
    %v2045 = vsub.f32 %v2043, %v2044
    %v2046 = vand.u32 %v2045, 4294901760
    %2047 = vmatpush1.msra.mxu0 %v2046
    %v2048 = vand.u32 %v254, 4294901760
    %v2049 = vsub.f32 %v254, %v2048
    %v2050 = vand.u32 %v2049, 4294901760
    %v2051 = vsub.f32 %v2049, %v2050
    %v2052 = vand.u32 %v2051, 4294901760
    %2053 = vmatprep.subr.mxu0 %v2052
    %v2054 = vand.u32 %v253, 4294901760
    %v2055 = vsub.f32 %v253, %v2054
    %v2056 = vand.u32 %v2055, 4294901760
    %v2057 = vsub.f32 %v2055, %v2056
    %v2058 = vand.u32 %v2057, 4294901760
    %2059 = vmatpush1.msra.mxu0 %v2058
    %v2060 = vand.u32 %v256, 4294901760
    %v2061 = vsub.f32 %v256, %v2060
    %v2062 = vand.u32 %v2061, 4294901760
    %v2063 = vsub.f32 %v2061, %v2062
    %v2064 = vand.u32 %v2063, 4294901760
    %2065 = vmatprep.subr.mxu0 %v2064
    %v2066 = vand.u32 %v255, 4294901760
    %v2067 = vsub.f32 %v255, %v2066
    %v2068 = vand.u32 %v2067, 4294901760
    %v2069 = vsub.f32 %v2067, %v2068
    %v2070 = vand.u32 %v2069, 4294901760
    %2071 = vmatpush1.msra.mxu0 %v2070
    %v2072 = vand.u32 %v128, 4294901760
    %2073 = vmatprep.mubr.f32.mxu0 %v2072
    %v2074 = vand.u32 %v127, 4294901760
    %2075 = vmatmul.mubr.f32.gmra.mrb[0].mxu0 %v2074
    %v2076 = vpop.f32.mrb[0].mxu0
    %v2077 = vadd.f32 %v1684, %v2076
    %v2078 = vpop.f32.mrb[0].mxu0
    %v2079 = vadd.f32 %v1686, %v2078
    %2080 = vdwg.mxu0
    %v2081 = vand.u32 %v194, 4294901760
    %v2082 = vsub.f32 %v194, %v2081
    %2083 = vmatprep.subr.mxu0 %v2082
    %v2084 = vand.u32 %v193, 4294901760
    %v2085 = vsub.f32 %v193, %v2084
    %2086 = vmatpush1.msra.mxu0 %v2085
    %v2087 = vand.u32 %v196, 4294901760
    %v2088 = vsub.f32 %v196, %v2087
    %2089 = vmatprep.subr.mxu0 %v2088
    %v2090 = vand.u32 %v195, 4294901760
    %v2091 = vsub.f32 %v195, %v2090
    %2092 = vmatpush1.msra.mxu0 %v2091
    %v2093 = vand.u32 %v198, 4294901760
    %v2094 = vsub.f32 %v198, %v2093
    %2095 = vmatprep.subr.mxu0 %v2094
    %v2096 = vand.u32 %v197, 4294901760
    %v2097 = vsub.f32 %v197, %v2096
    %2098 = vmatpush1.msra.mxu0 %v2097
    %v2099 = vand.u32 %v200, 4294901760
    %v2100 = vsub.f32 %v200, %v2099
    %2101 = vmatprep.subr.mxu0 %v2100
    %v2102 = vand.u32 %v199, 4294901760
    %v2103 = vsub.f32 %v199, %v2102
    %2104 = vmatpush1.msra.mxu0 %v2103
    %v2105 = vand.u32 %v202, 4294901760
    %v2106 = vsub.f32 %v202, %v2105
    %2107 = vmatprep.subr.mxu0 %v2106
    %v2108 = vand.u32 %v201, 4294901760
    %v2109 = vsub.f32 %v201, %v2108
    %2110 = vmatpush1.msra.mxu0 %v2109
    %v2111 = vand.u32 %v204, 4294901760
    %v2112 = vsub.f32 %v204, %v2111
    %2113 = vmatprep.subr.mxu0 %v2112
    %v2114 = vand.u32 %v203, 4294901760
    %v2115 = vsub.f32 %v203, %v2114
    %2116 = vmatpush1.msra.mxu0 %v2115
    %v2117 = vand.u32 %v206, 4294901760
    %v2118 = vsub.f32 %v206, %v2117
    %2119 = vmatprep.subr.mxu0 %v2118
    %v2120 = vand.u32 %v205, 4294901760
    %v2121 = vsub.f32 %v205, %v2120
    %2122 = vmatpush1.msra.mxu0 %v2121
    %v2123 = vand.u32 %v208, 4294901760
    %v2124 = vsub.f32 %v208, %v2123
    %2125 = vmatprep.subr.mxu0 %v2124
    %v2126 = vand.u32 %v207, 4294901760
    %v2127 = vsub.f32 %v207, %v2126
    %2128 = vmatpush1.msra.mxu0 %v2127
    %v2129 = vand.u32 %v210, 4294901760
    %v2130 = vsub.f32 %v210, %v2129
    %2131 = vmatprep.subr.mxu0 %v2130
    %v2132 = vand.u32 %v209, 4294901760
    %v2133 = vsub.f32 %v209, %v2132
    %2134 = vmatpush1.msra.mxu0 %v2133
    %v2135 = vand.u32 %v212, 4294901760
    %v2136 = vsub.f32 %v212, %v2135
    %2137 = vmatprep.subr.mxu0 %v2136
    %v2138 = vand.u32 %v211, 4294901760
    %v2139 = vsub.f32 %v211, %v2138
    %2140 = vmatpush1.msra.mxu0 %v2139
    %v2141 = vand.u32 %v214, 4294901760
    %v2142 = vsub.f32 %v214, %v2141
    %2143 = vmatprep.subr.mxu0 %v2142
    %v2144 = vand.u32 %v213, 4294901760
    %v2145 = vsub.f32 %v213, %v2144
    %2146 = vmatpush1.msra.mxu0 %v2145
    %v2147 = vand.u32 %v216, 4294901760
    %v2148 = vsub.f32 %v216, %v2147
    %2149 = vmatprep.subr.mxu0 %v2148
    %v2150 = vand.u32 %v215, 4294901760
    %v2151 = vsub.f32 %v215, %v2150
    %2152 = vmatpush1.msra.mxu0 %v2151
    %v2153 = vand.u32 %v218, 4294901760
    %v2154 = vsub.f32 %v218, %v2153
    %2155 = vmatprep.subr.mxu0 %v2154
    %v2156 = vand.u32 %v217, 4294901760
    %v2157 = vsub.f32 %v217, %v2156
    %2158 = vmatpush1.msra.mxu0 %v2157
    %v2159 = vand.u32 %v220, 4294901760
    %v2160 = vsub.f32 %v220, %v2159
    %2161 = vmatprep.subr.mxu0 %v2160
    %v2162 = vand.u32 %v219, 4294901760
    %v2163 = vsub.f32 %v219, %v2162
    %2164 = vmatpush1.msra.mxu0 %v2163
    %v2165 = vand.u32 %v222, 4294901760
    %v2166 = vsub.f32 %v222, %v2165
    %2167 = vmatprep.subr.mxu0 %v2166
    %v2168 = vand.u32 %v221, 4294901760
    %v2169 = vsub.f32 %v221, %v2168
    %2170 = vmatpush1.msra.mxu0 %v2169
    %v2171 = vand.u32 %v224, 4294901760
    %v2172 = vsub.f32 %v224, %v2171
    %2173 = vmatprep.subr.mxu0 %v2172
    %v2174 = vand.u32 %v223, 4294901760
    %v2175 = vsub.f32 %v223, %v2174
    %2176 = vmatpush1.msra.mxu0 %v2175
    %v2177 = vand.u32 %v226, 4294901760
    %v2178 = vsub.f32 %v226, %v2177
    %2179 = vmatprep.subr.mxu0 %v2178
    %v2180 = vand.u32 %v225, 4294901760
    %v2181 = vsub.f32 %v225, %v2180
    %2182 = vmatpush1.msra.mxu0 %v2181
    %v2183 = vand.u32 %v228, 4294901760
    %v2184 = vsub.f32 %v228, %v2183
    %2185 = vmatprep.subr.mxu0 %v2184
    %v2186 = vand.u32 %v227, 4294901760
    %v2187 = vsub.f32 %v227, %v2186
    %2188 = vmatpush1.msra.mxu0 %v2187
    %v2189 = vand.u32 %v230, 4294901760
    %v2190 = vsub.f32 %v230, %v2189
    %2191 = vmatprep.subr.mxu0 %v2190
    %v2192 = vand.u32 %v229, 4294901760
    %v2193 = vsub.f32 %v229, %v2192
    %2194 = vmatpush1.msra.mxu0 %v2193
    %v2195 = vand.u32 %v232, 4294901760
    %v2196 = vsub.f32 %v232, %v2195
    %2197 = vmatprep.subr.mxu0 %v2196
    %v2198 = vand.u32 %v231, 4294901760
    %v2199 = vsub.f32 %v231, %v2198
    %2200 = vmatpush1.msra.mxu0 %v2199
    %v2201 = vand.u32 %v234, 4294901760
    %v2202 = vsub.f32 %v234, %v2201
    %2203 = vmatprep.subr.mxu0 %v2202
    %v2204 = vand.u32 %v233, 4294901760
    %v2205 = vsub.f32 %v233, %v2204
    %2206 = vmatpush1.msra.mxu0 %v2205
    %v2207 = vand.u32 %v236, 4294901760
    %v2208 = vsub.f32 %v236, %v2207
    %2209 = vmatprep.subr.mxu0 %v2208
    %v2210 = vand.u32 %v235, 4294901760
    %v2211 = vsub.f32 %v235, %v2210
    %2212 = vmatpush1.msra.mxu0 %v2211
    %v2213 = vand.u32 %v238, 4294901760
    %v2214 = vsub.f32 %v238, %v2213
    %2215 = vmatprep.subr.mxu0 %v2214
    %v2216 = vand.u32 %v237, 4294901760
    %v2217 = vsub.f32 %v237, %v2216
    %2218 = vmatpush1.msra.mxu0 %v2217
    %v2219 = vand.u32 %v240, 4294901760
    %v2220 = vsub.f32 %v240, %v2219
    %2221 = vmatprep.subr.mxu0 %v2220
    %v2222 = vand.u32 %v239, 4294901760
    %v2223 = vsub.f32 %v239, %v2222
    %2224 = vmatpush1.msra.mxu0 %v2223
    %v2225 = vand.u32 %v242, 4294901760
    %v2226 = vsub.f32 %v242, %v2225
    %2227 = vmatprep.subr.mxu0 %v2226
    %v2228 = vand.u32 %v241, 4294901760
    %v2229 = vsub.f32 %v241, %v2228
    %2230 = vmatpush1.msra.mxu0 %v2229
    %v2231 = vand.u32 %v244, 4294901760
    %v2232 = vsub.f32 %v244, %v2231
    %2233 = vmatprep.subr.mxu0 %v2232
    %v2234 = vand.u32 %v243, 4294901760
    %v2235 = vsub.f32 %v243, %v2234
    %2236 = vmatpush1.msra.mxu0 %v2235
    %v2237 = vand.u32 %v246, 4294901760
    %v2238 = vsub.f32 %v246, %v2237
    %2239 = vmatprep.subr.mxu0 %v2238
    %v2240 = vand.u32 %v245, 4294901760
    %v2241 = vsub.f32 %v245, %v2240
    %2242 = vmatpush1.msra.mxu0 %v2241
    %v2243 = vand.u32 %v248, 4294901760
    %v2244 = vsub.f32 %v248, %v2243
    %2245 = vmatprep.subr.mxu0 %v2244
    %v2246 = vand.u32 %v247, 4294901760
    %v2247 = vsub.f32 %v247, %v2246
    %2248 = vmatpush1.msra.mxu0 %v2247
    %v2249 = vand.u32 %v250, 4294901760
    %v2250 = vsub.f32 %v250, %v2249
    %2251 = vmatprep.subr.mxu0 %v2250
    %v2252 = vand.u32 %v249, 4294901760
    %v2253 = vsub.f32 %v249, %v2252
    %2254 = vmatpush1.msra.mxu0 %v2253
    %v2255 = vand.u32 %v252, 4294901760
    %v2256 = vsub.f32 %v252, %v2255
    %2257 = vmatprep.subr.mxu0 %v2256
    %v2258 = vand.u32 %v251, 4294901760
    %v2259 = vsub.f32 %v251, %v2258
    %2260 = vmatpush1.msra.mxu0 %v2259
    %v2261 = vand.u32 %v254, 4294901760
    %v2262 = vsub.f32 %v254, %v2261
    %2263 = vmatprep.subr.mxu0 %v2262
    %v2264 = vand.u32 %v253, 4294901760
    %v2265 = vsub.f32 %v253, %v2264
    %2266 = vmatpush1.msra.mxu0 %v2265
    %v2267 = vand.u32 %v256, 4294901760
    %v2268 = vsub.f32 %v256, %v2267
    %2269 = vmatprep.subr.mxu0 %v2268
    %v2270 = vand.u32 %v255, 4294901760
    %v2271 = vsub.f32 %v255, %v2270
    %2272 = vmatpush1.msra.mxu0 %v2271
    %v2273 = vand.u32 %v128, 4294901760
    %v2274 = vsub.f32 %v128, %v2273
    %2275 = vmatprep.mubr.f32.mxu0 %v2274
    %v2276 = vand.u32 %v127, 4294901760
    %v2277 = vsub.f32 %v127, %v2276
    %2278 = vmatmul.mubr.f32.gmra.mrb[0].mxu0 %v2277
    %v2279 = vpop.f32.mrb[0].mxu0
    %v2280 = vadd.f32 %v2077, %v2279
    %v2281 = vpop.f32.mrb[0].mxu0
    %v2282 = vadd.f32 %v2079, %v2281
    %2283 = vdwg.mxu0
    %v2284 = vand.u32 %v194, 4294901760
    %2285 = vmatprep.subr.mxu0 %v2284
    %v2286 = vand.u32 %v193, 4294901760
    %2287 = vmatpush1.msra.mxu0 %v2286
    %v2288 = vand.u32 %v196, 4294901760
    %2289 = vmatprep.subr.mxu0 %v2288
    %v2290 = vand.u32 %v195, 4294901760
    %2291 = vmatpush1.msra.mxu0 %v2290
    %v2292 = vand.u32 %v198, 4294901760
    %2293 = vmatprep.subr.mxu0 %v2292
    %v2294 = vand.u32 %v197, 4294901760
    %2295 = vmatpush1.msra.mxu0 %v2294
    %v2296 = vand.u32 %v200, 4294901760
    %2297 = vmatprep.subr.mxu0 %v2296
    %v2298 = vand.u32 %v199, 4294901760
    %2299 = vmatpush1.msra.mxu0 %v2298
    %v2300 = vand.u32 %v202, 4294901760
    %2301 = vmatprep.subr.mxu0 %v2300
    %v2302 = vand.u32 %v201, 4294901760
    %2303 = vmatpush1.msra.mxu0 %v2302
    %v2304 = vand.u32 %v204, 4294901760
    %2305 = vmatprep.subr.mxu0 %v2304
    %v2306 = vand.u32 %v203, 4294901760
    %2307 = vmatpush1.msra.mxu0 %v2306
    %v2308 = vand.u32 %v206, 4294901760
    %2309 = vmatprep.subr.mxu0 %v2308
    %v2310 = vand.u32 %v205, 4294901760
    %2311 = vmatpush1.msra.mxu0 %v2310
    %v2312 = vand.u32 %v208, 4294901760
    %2313 = vmatprep.subr.mxu0 %v2312
    %v2314 = vand.u32 %v207, 4294901760
    %2315 = vmatpush1.msra.mxu0 %v2314
    %v2316 = vand.u32 %v210, 4294901760
    %2317 = vmatprep.subr.mxu0 %v2316
    %v2318 = vand.u32 %v209, 4294901760
    %2319 = vmatpush1.msra.mxu0 %v2318
    %v2320 = vand.u32 %v212, 4294901760
    %2321 = vmatprep.subr.mxu0 %v2320
    %v2322 = vand.u32 %v211, 4294901760
    %2323 = vmatpush1.msra.mxu0 %v2322
    %v2324 = vand.u32 %v214, 4294901760
    %2325 = vmatprep.subr.mxu0 %v2324
    %v2326 = vand.u32 %v213, 4294901760
    %2327 = vmatpush1.msra.mxu0 %v2326
    %v2328 = vand.u32 %v216, 4294901760
    %2329 = vmatprep.subr.mxu0 %v2328
    %v2330 = vand.u32 %v215, 4294901760
    %2331 = vmatpush1.msra.mxu0 %v2330
    %v2332 = vand.u32 %v218, 4294901760
    %2333 = vmatprep.subr.mxu0 %v2332
    %v2334 = vand.u32 %v217, 4294901760
    %2335 = vmatpush1.msra.mxu0 %v2334
    %v2336 = vand.u32 %v220, 4294901760
    %2337 = vmatprep.subr.mxu0 %v2336
    %v2338 = vand.u32 %v219, 4294901760
    %2339 = vmatpush1.msra.mxu0 %v2338
    %v2340 = vand.u32 %v222, 4294901760
    %2341 = vmatprep.subr.mxu0 %v2340
    %v2342 = vand.u32 %v221, 4294901760
    %2343 = vmatpush1.msra.mxu0 %v2342
    %v2344 = vand.u32 %v224, 4294901760
    %2345 = vmatprep.subr.mxu0 %v2344
    %v2346 = vand.u32 %v223, 4294901760
    %2347 = vmatpush1.msra.mxu0 %v2346
    %v2348 = vand.u32 %v226, 4294901760
    %2349 = vmatprep.subr.mxu0 %v2348
    %v2350 = vand.u32 %v225, 4294901760
    %2351 = vmatpush1.msra.mxu0 %v2350
    %v2352 = vand.u32 %v228, 4294901760
    %2353 = vmatprep.subr.mxu0 %v2352
    %v2354 = vand.u32 %v227, 4294901760
    %2355 = vmatpush1.msra.mxu0 %v2354
    %v2356 = vand.u32 %v230, 4294901760
    %2357 = vmatprep.subr.mxu0 %v2356
    %v2358 = vand.u32 %v229, 4294901760
    %2359 = vmatpush1.msra.mxu0 %v2358
    %v2360 = vand.u32 %v232, 4294901760
    %2361 = vmatprep.subr.mxu0 %v2360
    %v2362 = vand.u32 %v231, 4294901760
    %2363 = vmatpush1.msra.mxu0 %v2362
    %v2364 = vand.u32 %v234, 4294901760
    %2365 = vmatprep.subr.mxu0 %v2364
    %v2366 = vand.u32 %v233, 4294901760
    %2367 = vmatpush1.msra.mxu0 %v2366
    %v2368 = vand.u32 %v236, 4294901760
    %2369 = vmatprep.subr.mxu0 %v2368
    %v2370 = vand.u32 %v235, 4294901760
    %2371 = vmatpush1.msra.mxu0 %v2370
    %v2372 = vand.u32 %v238, 4294901760
    %2373 = vmatprep.subr.mxu0 %v2372
    %v2374 = vand.u32 %v237, 4294901760
    %2375 = vmatpush1.msra.mxu0 %v2374
    %v2376 = vand.u32 %v240, 4294901760
    %2377 = vmatprep.subr.mxu0 %v2376
    %v2378 = vand.u32 %v239, 4294901760
    %2379 = vmatpush1.msra.mxu0 %v2378
    %v2380 = vand.u32 %v242, 4294901760
    %2381 = vmatprep.subr.mxu0 %v2380
    %v2382 = vand.u32 %v241, 4294901760
    %2383 = vmatpush1.msra.mxu0 %v2382
    %v2384 = vand.u32 %v244, 4294901760
    %2385 = vmatprep.subr.mxu0 %v2384
    %v2386 = vand.u32 %v243, 4294901760
    %2387 = vmatpush1.msra.mxu0 %v2386
    %v2388 = vand.u32 %v246, 4294901760
    %2389 = vmatprep.subr.mxu0 %v2388
    %v2390 = vand.u32 %v245, 4294901760
    %2391 = vmatpush1.msra.mxu0 %v2390
    %v2392 = vand.u32 %v248, 4294901760
    %2393 = vmatprep.subr.mxu0 %v2392
    %v2394 = vand.u32 %v247, 4294901760
    %2395 = vmatpush1.msra.mxu0 %v2394
    %v2396 = vand.u32 %v250, 4294901760
    %2397 = vmatprep.subr.mxu0 %v2396
    %v2398 = vand.u32 %v249, 4294901760
    %2399 = vmatpush1.msra.mxu0 %v2398
    %v2400 = vand.u32 %v252, 4294901760
    %2401 = vmatprep.subr.mxu0 %v2400
    %v2402 = vand.u32 %v251, 4294901760
    %2403 = vmatpush1.msra.mxu0 %v2402
    %v2404 = vand.u32 %v254, 4294901760
    %2405 = vmatprep.subr.mxu0 %v2404
    %v2406 = vand.u32 %v253, 4294901760
    %2407 = vmatpush1.msra.mxu0 %v2406
    %v2408 = vand.u32 %v256, 4294901760
    %2409 = vmatprep.subr.mxu0 %v2408
    %v2410 = vand.u32 %v255, 4294901760
    %2411 = vmatpush1.msra.mxu0 %v2410
    %v2412 = vand.u32 %v128, 4294901760
    %v2413 = vsub.f32 %v128, %v2412
    %v2414 = vand.u32 %v2413, 4294901760
    %2415 = vmatprep.mubr.f32.mxu0 %v2414
    %v2416 = vand.u32 %v127, 4294901760
    %v2417 = vsub.f32 %v127, %v2416
    %v2418 = vand.u32 %v2417, 4294901760
    %2419 = vmatmul.mubr.f32.gmra.mrb[0].mxu0 %v2418
    %v2420 = vpop.f32.mrb[0].mxu0
    %v2421 = vadd.f32 %v2280, %v2420
    %v2422 = vpop.f32.mrb[0].mxu0
    %v2423 = vadd.f32 %v2282, %v2422
    %2424 = vdwg.mxu0
    %v2425 = vand.u32 %v194, 4294901760
    %v2426 = vsub.f32 %v194, %v2425
    %v2427 = vand.u32 %v2426, 4294901760
    %2428 = vmatprep.subr.mxu0 %v2427
    %v2429 = vand.u32 %v193, 4294901760
    %v2430 = vsub.f32 %v193, %v2429
    %v2431 = vand.u32 %v2430, 4294901760
    %2432 = vmatpush1.msra.mxu0 %v2431
    %v2433 = vand.u32 %v196, 4294901760
    %v2434 = vsub.f32 %v196, %v2433
    %v2435 = vand.u32 %v2434, 4294901760
    %2436 = vmatprep.subr.mxu0 %v2435
    %v2437 = vand.u32 %v195, 4294901760
    %v2438 = vsub.f32 %v195, %v2437
    %v2439 = vand.u32 %v2438, 4294901760
    %2440 = vmatpush1.msra.mxu0 %v2439
    %v2441 = vand.u32 %v198, 4294901760
    %v2442 = vsub.f32 %v198, %v2441
    %v2443 = vand.u32 %v2442, 4294901760
    %2444 = vmatprep.subr.mxu0 %v2443
    %v2445 = vand.u32 %v197, 4294901760
    %v2446 = vsub.f32 %v197, %v2445
    %v2447 = vand.u32 %v2446, 4294901760
    %2448 = vmatpush1.msra.mxu0 %v2447
    %v2449 = vand.u32 %v200, 4294901760
    %v2450 = vsub.f32 %v200, %v2449
    %v2451 = vand.u32 %v2450, 4294901760
    %2452 = vmatprep.subr.mxu0 %v2451
    %v2453 = vand.u32 %v199, 4294901760
    %v2454 = vsub.f32 %v199, %v2453
    %v2455 = vand.u32 %v2454, 4294901760
    %2456 = vmatpush1.msra.mxu0 %v2455
    %v2457 = vand.u32 %v202, 4294901760
    %v2458 = vsub.f32 %v202, %v2457
    %v2459 = vand.u32 %v2458, 4294901760
    %2460 = vmatprep.subr.mxu0 %v2459
    %v2461 = vand.u32 %v201, 4294901760
    %v2462 = vsub.f32 %v201, %v2461
    %v2463 = vand.u32 %v2462, 4294901760
    %2464 = vmatpush1.msra.mxu0 %v2463
    %v2465 = vand.u32 %v204, 4294901760
    %v2466 = vsub.f32 %v204, %v2465
    %v2467 = vand.u32 %v2466, 4294901760
    %2468 = vmatprep.subr.mxu0 %v2467
    %v2469 = vand.u32 %v203, 4294901760
    %v2470 = vsub.f32 %v203, %v2469
    %v2471 = vand.u32 %v2470, 4294901760
    %2472 = vmatpush1.msra.mxu0 %v2471
    %v2473 = vand.u32 %v206, 4294901760
    %v2474 = vsub.f32 %v206, %v2473
    %v2475 = vand.u32 %v2474, 4294901760
    %2476 = vmatprep.subr.mxu0 %v2475
    %v2477 = vand.u32 %v205, 4294901760
    %v2478 = vsub.f32 %v205, %v2477
    %v2479 = vand.u32 %v2478, 4294901760
    %2480 = vmatpush1.msra.mxu0 %v2479
    %v2481 = vand.u32 %v208, 4294901760
    %v2482 = vsub.f32 %v208, %v2481
    %v2483 = vand.u32 %v2482, 4294901760
    %2484 = vmatprep.subr.mxu0 %v2483
    %v2485 = vand.u32 %v207, 4294901760
    %v2486 = vsub.f32 %v207, %v2485
    %v2487 = vand.u32 %v2486, 4294901760
    %2488 = vmatpush1.msra.mxu0 %v2487
    %v2489 = vand.u32 %v210, 4294901760
    %v2490 = vsub.f32 %v210, %v2489
    %v2491 = vand.u32 %v2490, 4294901760
    %2492 = vmatprep.subr.mxu0 %v2491
    %v2493 = vand.u32 %v209, 4294901760
    %v2494 = vsub.f32 %v209, %v2493
    %v2495 = vand.u32 %v2494, 4294901760
    %2496 = vmatpush1.msra.mxu0 %v2495
    %v2497 = vand.u32 %v212, 4294901760
    %v2498 = vsub.f32 %v212, %v2497
    %v2499 = vand.u32 %v2498, 4294901760
    %2500 = vmatprep.subr.mxu0 %v2499
    %v2501 = vand.u32 %v211, 4294901760
    %v2502 = vsub.f32 %v211, %v2501
    %v2503 = vand.u32 %v2502, 4294901760
    %2504 = vmatpush1.msra.mxu0 %v2503
    %v2505 = vand.u32 %v214, 4294901760
    %v2506 = vsub.f32 %v214, %v2505
    %v2507 = vand.u32 %v2506, 4294901760
    %2508 = vmatprep.subr.mxu0 %v2507
    %v2509 = vand.u32 %v213, 4294901760
    %v2510 = vsub.f32 %v213, %v2509
    %v2511 = vand.u32 %v2510, 4294901760
    %2512 = vmatpush1.msra.mxu0 %v2511
    %v2513 = vand.u32 %v216, 4294901760
    %v2514 = vsub.f32 %v216, %v2513
    %v2515 = vand.u32 %v2514, 4294901760
    %2516 = vmatprep.subr.mxu0 %v2515
    %v2517 = vand.u32 %v215, 4294901760
    %v2518 = vsub.f32 %v215, %v2517
    %v2519 = vand.u32 %v2518, 4294901760
    %2520 = vmatpush1.msra.mxu0 %v2519
    %v2521 = vand.u32 %v218, 4294901760
    %v2522 = vsub.f32 %v218, %v2521
    %v2523 = vand.u32 %v2522, 4294901760
    %2524 = vmatprep.subr.mxu0 %v2523
    %v2525 = vand.u32 %v217, 4294901760
    %v2526 = vsub.f32 %v217, %v2525
    %v2527 = vand.u32 %v2526, 4294901760
    %2528 = vmatpush1.msra.mxu0 %v2527
    %v2529 = vand.u32 %v220, 4294901760
    %v2530 = vsub.f32 %v220, %v2529
    %v2531 = vand.u32 %v2530, 4294901760
    %2532 = vmatprep.subr.mxu0 %v2531
    %v2533 = vand.u32 %v219, 4294901760
    %v2534 = vsub.f32 %v219, %v2533
    %v2535 = vand.u32 %v2534, 4294901760
    %2536 = vmatpush1.msra.mxu0 %v2535
    %v2537 = vand.u32 %v222, 4294901760
    %v2538 = vsub.f32 %v222, %v2537
    %v2539 = vand.u32 %v2538, 4294901760
    %2540 = vmatprep.subr.mxu0 %v2539
    %v2541 = vand.u32 %v221, 4294901760
    %v2542 = vsub.f32 %v221, %v2541
    %v2543 = vand.u32 %v2542, 4294901760
    %2544 = vmatpush1.msra.mxu0 %v2543
    %v2545 = vand.u32 %v224, 4294901760
    %v2546 = vsub.f32 %v224, %v2545
    %v2547 = vand.u32 %v2546, 4294901760
    %2548 = vmatprep.subr.mxu0 %v2547
    %v2549 = vand.u32 %v223, 4294901760
    %v2550 = vsub.f32 %v223, %v2549
    %v2551 = vand.u32 %v2550, 4294901760
    %2552 = vmatpush1.msra.mxu0 %v2551
    %v2553 = vand.u32 %v226, 4294901760
    %v2554 = vsub.f32 %v226, %v2553
    %v2555 = vand.u32 %v2554, 4294901760
    %2556 = vmatprep.subr.mxu0 %v2555
    %v2557 = vand.u32 %v225, 4294901760
    %v2558 = vsub.f32 %v225, %v2557
    %v2559 = vand.u32 %v2558, 4294901760
    %2560 = vmatpush1.msra.mxu0 %v2559
    %v2561 = vand.u32 %v228, 4294901760
    %v2562 = vsub.f32 %v228, %v2561
    %v2563 = vand.u32 %v2562, 4294901760
    %2564 = vmatprep.subr.mxu0 %v2563
    %v2565 = vand.u32 %v227, 4294901760
    %v2566 = vsub.f32 %v227, %v2565
    %v2567 = vand.u32 %v2566, 4294901760
    %2568 = vmatpush1.msra.mxu0 %v2567
    %v2569 = vand.u32 %v230, 4294901760
    %v2570 = vsub.f32 %v230, %v2569
    %v2571 = vand.u32 %v2570, 4294901760
    %2572 = vmatprep.subr.mxu0 %v2571
    %v2573 = vand.u32 %v229, 4294901760
    %v2574 = vsub.f32 %v229, %v2573
    %v2575 = vand.u32 %v2574, 4294901760
    %2576 = vmatpush1.msra.mxu0 %v2575
    %v2577 = vand.u32 %v232, 4294901760
    %v2578 = vsub.f32 %v232, %v2577
    %v2579 = vand.u32 %v2578, 4294901760
    %2580 = vmatprep.subr.mxu0 %v2579
    %v2581 = vand.u32 %v231, 4294901760
    %v2582 = vsub.f32 %v231, %v2581
    %v2583 = vand.u32 %v2582, 4294901760
    %2584 = vmatpush1.msra.mxu0 %v2583
    %v2585 = vand.u32 %v234, 4294901760
    %v2586 = vsub.f32 %v234, %v2585
    %v2587 = vand.u32 %v2586, 4294901760
    %2588 = vmatprep.subr.mxu0 %v2587
    %v2589 = vand.u32 %v233, 4294901760
    %v2590 = vsub.f32 %v233, %v2589
    %v2591 = vand.u32 %v2590, 4294901760
    %2592 = vmatpush1.msra.mxu0 %v2591
    %v2593 = vand.u32 %v236, 4294901760
    %v2594 = vsub.f32 %v236, %v2593
    %v2595 = vand.u32 %v2594, 4294901760
    %2596 = vmatprep.subr.mxu0 %v2595
    %v2597 = vand.u32 %v235, 4294901760
    %v2598 = vsub.f32 %v235, %v2597
    %v2599 = vand.u32 %v2598, 4294901760
    %2600 = vmatpush1.msra.mxu0 %v2599
    %v2601 = vand.u32 %v238, 4294901760
    %v2602 = vsub.f32 %v238, %v2601
    %v2603 = vand.u32 %v2602, 4294901760
    %2604 = vmatprep.subr.mxu0 %v2603
    %v2605 = vand.u32 %v237, 4294901760
    %v2606 = vsub.f32 %v237, %v2605
    %v2607 = vand.u32 %v2606, 4294901760
    %2608 = vmatpush1.msra.mxu0 %v2607
    %v2609 = vand.u32 %v240, 4294901760
    %v2610 = vsub.f32 %v240, %v2609
    %v2611 = vand.u32 %v2610, 4294901760
    %2612 = vmatprep.subr.mxu0 %v2611
    %v2613 = vand.u32 %v239, 4294901760
    %v2614 = vsub.f32 %v239, %v2613
    %v2615 = vand.u32 %v2614, 4294901760
    %2616 = vmatpush1.msra.mxu0 %v2615
    %v2617 = vand.u32 %v242, 4294901760
    %v2618 = vsub.f32 %v242, %v2617
    %v2619 = vand.u32 %v2618, 4294901760
    %2620 = vmatprep.subr.mxu0 %v2619
    %v2621 = vand.u32 %v241, 4294901760
    %v2622 = vsub.f32 %v241, %v2621
    %v2623 = vand.u32 %v2622, 4294901760
    %2624 = vmatpush1.msra.mxu0 %v2623
    %v2625 = vand.u32 %v244, 4294901760
    %v2626 = vsub.f32 %v244, %v2625
    %v2627 = vand.u32 %v2626, 4294901760
    %2628 = vmatprep.subr.mxu0 %v2627
    %v2629 = vand.u32 %v243, 4294901760
    %v2630 = vsub.f32 %v243, %v2629
    %v2631 = vand.u32 %v2630, 4294901760
    %2632 = vmatpush1.msra.mxu0 %v2631
    %v2633 = vand.u32 %v246, 4294901760
    %v2634 = vsub.f32 %v246, %v2633
    %v2635 = vand.u32 %v2634, 4294901760
    %2636 = vmatprep.subr.mxu0 %v2635
    %v2637 = vand.u32 %v245, 4294901760
    %v2638 = vsub.f32 %v245, %v2637
    %v2639 = vand.u32 %v2638, 4294901760
    %2640 = vmatpush1.msra.mxu0 %v2639
    %v2641 = vand.u32 %v248, 4294901760
    %v2642 = vsub.f32 %v248, %v2641
    %v2643 = vand.u32 %v2642, 4294901760
    %2644 = vmatprep.subr.mxu0 %v2643
    %v2645 = vand.u32 %v247, 4294901760
    %v2646 = vsub.f32 %v247, %v2645
    %v2647 = vand.u32 %v2646, 4294901760
    %2648 = vmatpush1.msra.mxu0 %v2647
    %v2649 = vand.u32 %v250, 4294901760
    %v2650 = vsub.f32 %v250, %v2649
    %v2651 = vand.u32 %v2650, 4294901760
    %2652 = vmatprep.subr.mxu0 %v2651
    %v2653 = vand.u32 %v249, 4294901760
    %v2654 = vsub.f32 %v249, %v2653
    %v2655 = vand.u32 %v2654, 4294901760
    %2656 = vmatpush1.msra.mxu0 %v2655
    %v2657 = vand.u32 %v252, 4294901760
    %v2658 = vsub.f32 %v252, %v2657
    %v2659 = vand.u32 %v2658, 4294901760
    %2660 = vmatprep.subr.mxu0 %v2659
    %v2661 = vand.u32 %v251, 4294901760
    %v2662 = vsub.f32 %v251, %v2661
    %v2663 = vand.u32 %v2662, 4294901760
    %2664 = vmatpush1.msra.mxu0 %v2663
    %v2665 = vand.u32 %v254, 4294901760
    %v2666 = vsub.f32 %v254, %v2665
    %v2667 = vand.u32 %v2666, 4294901760
    %2668 = vmatprep.subr.mxu0 %v2667
    %v2669 = vand.u32 %v253, 4294901760
    %v2670 = vsub.f32 %v253, %v2669
    %v2671 = vand.u32 %v2670, 4294901760
    %2672 = vmatpush1.msra.mxu0 %v2671
    %v2673 = vand.u32 %v256, 4294901760
    %v2674 = vsub.f32 %v256, %v2673
    %v2675 = vand.u32 %v2674, 4294901760
    %2676 = vmatprep.subr.mxu0 %v2675
    %v2677 = vand.u32 %v255, 4294901760
    %v2678 = vsub.f32 %v255, %v2677
    %v2679 = vand.u32 %v2678, 4294901760
    %2680 = vmatpush1.msra.mxu0 %v2679
    %v2681 = vand.u32 %v128, 4294901760
    %2682 = vmatprep.mubr.f32.mxu0 %v2681
    %v2683 = vand.u32 %v127, 4294901760
    %2684 = vmatmul.mubr.f32.gmra.mrb[0].mxu0 %v2683
    %v2685 = vpop.f32.mrb[0].mxu0
    %v2686 = vadd.f32 %v2421, %v2685
    %v2687 = vpop.f32.mrb[0].mxu0
    %v2688 = vadd.f32 %v2423, %v2687
    %2689 = vdwg.mxu0
    %v2690 = vand.u32 %v194, 4294901760
    %2691 = vmatprep.subr.mxu0 %v2690
    %v2692 = vand.u32 %v193, 4294901760
    %2693 = vmatpush1.msra.mxu0 %v2692
    %v2694 = vand.u32 %v196, 4294901760
    %2695 = vmatprep.subr.mxu0 %v2694
    %v2696 = vand.u32 %v195, 4294901760
    %2697 = vmatpush1.msra.mxu0 %v2696
    %v2698 = vand.u32 %v198, 4294901760
    %2699 = vmatprep.subr.mxu0 %v2698
    %v2700 = vand.u32 %v197, 4294901760
    %2701 = vmatpush1.msra.mxu0 %v2700
    %v2702 = vand.u32 %v200, 4294901760
    %2703 = vmatprep.subr.mxu0 %v2702
    %v2704 = vand.u32 %v199, 4294901760
    %2705 = vmatpush1.msra.mxu0 %v2704
    %v2706 = vand.u32 %v202, 4294901760
    %2707 = vmatprep.subr.mxu0 %v2706
    %v2708 = vand.u32 %v201, 4294901760
    %2709 = vmatpush1.msra.mxu0 %v2708
    %v2710 = vand.u32 %v204, 4294901760
    %2711 = vmatprep.subr.mxu0 %v2710
    %v2712 = vand.u32 %v203, 4294901760
    %2713 = vmatpush1.msra.mxu0 %v2712
    %v2714 = vand.u32 %v206, 4294901760
    %2715 = vmatprep.subr.mxu0 %v2714
    %v2716 = vand.u32 %v205, 4294901760
    %2717 = vmatpush1.msra.mxu0 %v2716
    %v2718 = vand.u32 %v208, 4294901760
    %2719 = vmatprep.subr.mxu0 %v2718
    %v2720 = vand.u32 %v207, 4294901760
    %2721 = vmatpush1.msra.mxu0 %v2720
    %v2722 = vand.u32 %v210, 4294901760
    %2723 = vmatprep.subr.mxu0 %v2722
    %v2724 = vand.u32 %v209, 4294901760
    %2725 = vmatpush1.msra.mxu0 %v2724
    %v2726 = vand.u32 %v212, 4294901760
    %2727 = vmatprep.subr.mxu0 %v2726
    %v2728 = vand.u32 %v211, 4294901760
    %2729 = vmatpush1.msra.mxu0 %v2728
    %v2730 = vand.u32 %v214, 4294901760
    %2731 = vmatprep.subr.mxu0 %v2730
    %v2732 = vand.u32 %v213, 4294901760
    %2733 = vmatpush1.msra.mxu0 %v2732
    %v2734 = vand.u32 %v216, 4294901760
    %2735 = vmatprep.subr.mxu0 %v2734
    %v2736 = vand.u32 %v215, 4294901760
    %2737 = vmatpush1.msra.mxu0 %v2736
    %v2738 = vand.u32 %v218, 4294901760
    %2739 = vmatprep.subr.mxu0 %v2738
    %v2740 = vand.u32 %v217, 4294901760
    %2741 = vmatpush1.msra.mxu0 %v2740
    %v2742 = vand.u32 %v220, 4294901760
    %2743 = vmatprep.subr.mxu0 %v2742
    %v2744 = vand.u32 %v219, 4294901760
    %2745 = vmatpush1.msra.mxu0 %v2744
    %v2746 = vand.u32 %v222, 4294901760
    %2747 = vmatprep.subr.mxu0 %v2746
    %v2748 = vand.u32 %v221, 4294901760
    %2749 = vmatpush1.msra.mxu0 %v2748
    %v2750 = vand.u32 %v224, 4294901760
    %2751 = vmatprep.subr.mxu0 %v2750
    %v2752 = vand.u32 %v223, 4294901760
    %2753 = vmatpush1.msra.mxu0 %v2752
    %v2754 = vand.u32 %v226, 4294901760
    %2755 = vmatprep.subr.mxu0 %v2754
    %v2756 = vand.u32 %v225, 4294901760
    %2757 = vmatpush1.msra.mxu0 %v2756
    %v2758 = vand.u32 %v228, 4294901760
    %2759 = vmatprep.subr.mxu0 %v2758
    %v2760 = vand.u32 %v227, 4294901760
    %2761 = vmatpush1.msra.mxu0 %v2760
    %v2762 = vand.u32 %v230, 4294901760
    %2763 = vmatprep.subr.mxu0 %v2762
    %v2764 = vand.u32 %v229, 4294901760
    %2765 = vmatpush1.msra.mxu0 %v2764
    %v2766 = vand.u32 %v232, 4294901760
    %2767 = vmatprep.subr.mxu0 %v2766
    %v2768 = vand.u32 %v231, 4294901760
    %2769 = vmatpush1.msra.mxu0 %v2768
    %v2770 = vand.u32 %v234, 4294901760
    %2771 = vmatprep.subr.mxu0 %v2770
    %v2772 = vand.u32 %v233, 4294901760
    %2773 = vmatpush1.msra.mxu0 %v2772
    %v2774 = vand.u32 %v236, 4294901760
    %2775 = vmatprep.subr.mxu0 %v2774
    %v2776 = vand.u32 %v235, 4294901760
    %2777 = vmatpush1.msra.mxu0 %v2776
    %v2778 = vand.u32 %v238, 4294901760
    %2779 = vmatprep.subr.mxu0 %v2778
    %v2780 = vand.u32 %v237, 4294901760
    %2781 = vmatpush1.msra.mxu0 %v2780
    %v2782 = vand.u32 %v240, 4294901760
    %2783 = vmatprep.subr.mxu0 %v2782
    %v2784 = vand.u32 %v239, 4294901760
    %2785 = vmatpush1.msra.mxu0 %v2784
    %v2786 = vand.u32 %v242, 4294901760
    %2787 = vmatprep.subr.mxu0 %v2786
    %v2788 = vand.u32 %v241, 4294901760
    %2789 = vmatpush1.msra.mxu0 %v2788
    %v2790 = vand.u32 %v244, 4294901760
    %2791 = vmatprep.subr.mxu0 %v2790
    %v2792 = vand.u32 %v243, 4294901760
    %2793 = vmatpush1.msra.mxu0 %v2792
    %v2794 = vand.u32 %v246, 4294901760
    %2795 = vmatprep.subr.mxu0 %v2794
    %v2796 = vand.u32 %v245, 4294901760
    %2797 = vmatpush1.msra.mxu0 %v2796
    %v2798 = vand.u32 %v248, 4294901760
    %2799 = vmatprep.subr.mxu0 %v2798
    %v2800 = vand.u32 %v247, 4294901760
    %2801 = vmatpush1.msra.mxu0 %v2800
    %v2802 = vand.u32 %v250, 4294901760
    %2803 = vmatprep.subr.mxu0 %v2802
    %v2804 = vand.u32 %v249, 4294901760
    %2805 = vmatpush1.msra.mxu0 %v2804
    %v2806 = vand.u32 %v252, 4294901760
    %2807 = vmatprep.subr.mxu0 %v2806
    %v2808 = vand.u32 %v251, 4294901760
    %2809 = vmatpush1.msra.mxu0 %v2808
    %v2810 = vand.u32 %v254, 4294901760
    %2811 = vmatprep.subr.mxu0 %v2810
    %v2812 = vand.u32 %v253, 4294901760
    %2813 = vmatpush1.msra.mxu0 %v2812
    %v2814 = vand.u32 %v256, 4294901760
    %2815 = vmatprep.subr.mxu0 %v2814
    %v2816 = vand.u32 %v255, 4294901760
    %2817 = vmatpush1.msra.mxu0 %v2816
    %v2818 = vand.u32 %v128, 4294901760
    %2819 = vmatprep.mubr.f32.mxu0 %v2818
    %v2820 = vand.u32 %v127, 4294901760
    %2821 = vmatmul.mubr.f32.gmra.mrb[0].mxu0 %v2820
    %v2822 = vpop.f32.mrb[0].mxu0
    %v2823 = vadd.f32 %v2686, %v2822
    %v2824 = vpop.f32.mrb[0].mxu0
    %v2825 = vadd.f32 %v2688, %v2824
    %2826 = vdwg.mxu0
    %v2827 = vxor.u32 %v2823, 2147483648
    %v2828 = vxor.u32 %v2825, 2147483648
    %v2829 = vmul.f32 %v2827, 1.442695
    %v2830 = vpow.pop %v2829
    %v2831 = vmul.f32 %v2828, 1.442695
    %v2832 = vpow.pop %v2831
    %v2833 = vadd.f32 %v2830, 1.0
    %v2834 = vadd.f32 %v2832, 1.0
    %v2835 = vrcp.pop %v2833
    %v2836 = vmul.f32 1.0, %v2835
    %v2837 = vrcp.pop %v2834
    %v2838 = vmul.f32 1.0, %v2837
    %v2839 = vlaneseq
    %v2840 = vshrl.u32 %v2839, 7
    %v2841 = vsub.s32 0, %v2840
    %v2842 = vrot.slane %v2836, %v2841
    %v2843 = vlaneseq
    %v2844 = vshrl.u32 %v2843, 7
    %v2845 = vsub.s32 0, %v2844
    %v2846 = vrot.slane %v2838, %v2845
    %v2847 = vmul.f32 %v42, %v2842
    %v2848 = vmul.f32 %v43, %v2846
    %v2849 = vlaneseq
    %v2850 = vshrl.u32 %v2849, 7
    %v2851 = vsub.s32 1, %v2850
    %v2852 = vrot.slane %v2836, %v2851
    %v2853 = vlaneseq
    %v2854 = vshrl.u32 %v2853, 7
    %v2855 = vsub.s32 1, %v2854
    %v2856 = vrot.slane %v2838, %v2855
    %v2857 = vmul.f32 %v42, %v2852
    %v2858 = vmul.f32 %v43, %v2856
    %v2859 = vsel %vm44, %v2847, %v2857
    %v2860 = vsel %vm44, %v2848, %v2858
    %2861 = vst [vmem:[#allocation8] sm:$0xff] %v2859
    %2862 = vst [vmem:[#allocation8 + $0x8] sm:$0xff] %v2860
    // Predicated region
    $region22: #{tpu_custom_call.1} parent=1 // pred_check
      _
    $region23: #{tpu_custom_call.1} parent=1 // pred_check_branch
      %2864 = sbr.rel (0) target = $region25
    $region24: #{tpu_custom_call.1} parent=1 // pred_region
      %s2866 = ssub.s32 256, 256
      %2867 = vsyncadd [#allocation5], %s2866
      %s2869 = sshll.u32 [#allocation8], 4
      %s2870 = int_to_ptr.vmem [resolvable:$true] %s2869
      %2872 = dma.vmem_to_hbm [thread:$0]  %s2870, 256, %s3, [#allocation5]
    $region25: #{tpu_custom_call.1} parent=1 // pred_fallthru
      _
    // Predicated region
    $region26: #{tpu_custom_call.1} parent=1 // pred_check
      _
    $region27: #{tpu_custom_call.1} parent=1 // pred_check_branch
      %2874 = sbr.rel (0) target = $region29
    $region28: #{tpu_custom_call.1} parent=1 // pred_region
      %2875 = dma.done [#allocation5], 256
    $region29: #{tpu_custom_call.1} parent=1 // pred_fallthru
      _
    %2876 = vsyncpa [#allocation4], 1
    %2877 = vsyncpa [#allocation7], 1
    %2878 = vsyncpa [#allocation5], 1

</llo_original>
